<compile_context>
chip_gen: v5e
topology: v5e:2x2
jax: 0.10.0
libtpu: 0.0.40
codegen_flags: <defaults>
</compile_context>

<pallas_src>
import jax
import jax.numpy as jnp
from jax.experimental import pallas as pl
from jax.experimental.pallas import tpu as pltpu

IN_FEATURES = 768
OUT_FEATURES = 1000
OUT_PADDED = 1024          # next multiple of 128 -> lane-dense output / DMA


def linear_kernel(x_ref, w_ref, b_ref, o_ref):
    # x_ref: (B, IN) bf16, w_ref: (IN, OUT_PADDED) bf16,
    # b_ref: (1, OUT_PADDED) f32, o_ref: (B, OUT_PADDED) f32.
    # Single MXU matmul with f32 accumulation, bias add in f32.
    acc = jnp.dot(x_ref[...], w_ref[...], preferred_element_type=jnp.float32)
    o_ref[...] = (acc + b_ref[...]).astype(o_ref.dtype)


def linear(x, w_pad, b_pad):
    """x: [B, IN] (f32 or bf16), w_pad: [IN, OUT_PADDED] bf16,
    b_pad: [1, OUT_PADDED] f32.  Returns [B, OUT_FEATURES] f32."""
    B, IN = x.shape
    IN2, OUTP = w_pad.shape
    assert IN == IN2 == IN_FEATURES and OUTP == OUT_PADDED
    assert b_pad.shape == (1, OUT_PADDED)

    x_bf16 = x if x.dtype == jnp.bfloat16 else x.astype(jnp.bfloat16)

    cost = pl.CostEstimate(
        flops=2 * B * IN * OUT_PADDED,
        transcendentals=0,
        bytes_accessed=(w_pad.size * 2 + x_bf16.size * 2
                        + b_pad.size * 4 + B * OUT_PADDED * 4),
    )

    # Single full-width block, no grid: the whole (tiny) problem fits VMEM
    # (W bf16 = 1.5 MiB), so grid steps would only add ~0.35 us/step overhead.
    out_pad = pl.pallas_call(
        linear_kernel,
        out_shape=jax.ShapeDtypeStruct((B, OUT_PADDED), jnp.float32),
        in_specs=[
            pl.BlockSpec((B, IN), lambda: (0, 0)),              # x
            pl.BlockSpec((IN, OUT_PADDED), lambda: (0, 0)),     # W
            pl.BlockSpec((1, OUT_PADDED), lambda: (0, 0)),      # bias
        ],
        out_specs=pl.BlockSpec((B, OUT_PADDED), lambda: (0, 0)),
        compiler_params=pltpu.CompilerParams(
            vmem_limit_bytes=8 * 1024 * 1024,
        ),
        cost_estimate=cost,
    )(x_bf16, w_pad, b_pad)

    return out_pad[:, :OUT_FEATURES]


if __name__ == "__main__":
    key = jax.random.PRNGKey(0)
    k_x, k_w, k_b = jax.random.split(key, 3)

    # Input as in the PyTorch module: x307 ~ [1, 768]
    x = jax.random.normal(k_x, (1, IN_FEATURES), dtype=jnp.float32)

    # Deterministic parameter init mimicking PyTorch Linear default:
    # U(-1/sqrt(fan_in), 1/sqrt(fan_in)).  PyTorch weight is [OUT, IN]; we
    # store it pre-transposed as [IN, OUT].
    bound = 1.0 / (IN_FEATURES ** 0.5)
    w_f32 = jax.random.uniform(
        k_w, (IN_FEATURES, OUT_FEATURES), dtype=jnp.float32,
        minval=-bound, maxval=bound)
    b_f32 = jax.random.uniform(
        k_b, (1, OUT_FEATURES), dtype=jnp.float32,
        minval=-bound, maxval=bound)

    # Pad OUT to 1024 and ship weights as bf16 (padding columns are zero).
    w_bf16_pad = jnp.zeros((IN_FEATURES, OUT_PADDED), dtype=jnp.bfloat16)
    w_bf16_pad = w_bf16_pad.at[:, :OUT_FEATURES].set(w_f32.astype(jnp.bfloat16))
    b_f32_pad = jnp.zeros((1, OUT_PADDED), dtype=jnp.float32)
    b_f32_pad = b_f32_pad.at[:, :OUT_FEATURES].set(b_f32)

    out = linear(x, w_bf16_pad, b_f32_pad)
    out = jax.block_until_ready(out)
    assert out.shape == (1, OUT_FEATURES)

    # Reference with the same bf16 inputs and f32 accumulation.
    ref = (x.astype(jnp.bfloat16).astype(jnp.float32)
           @ w_bf16_pad[:, :OUT_FEATURES].astype(jnp.float32)) + b_f32
    assert jnp.allclose(out, ref, atol=1e-3, rtol=1e-3)

    # Sanity check against full-precision f32 math (bf16-limited tolerance).
    ref_f32 = x @ w_f32 + b_f32
    assert jnp.allclose(out, ref_f32, atol=5e-2, rtol=5e-2)

    print("KERNEL_OK")
</pallas_src>

<mosaic_0001>
module attributes {stable_mosaic.version = 11 : i64} {
  func.func @linear_kernel(%arg0: memref<1x768xbf16, #tpu.memory_space<vmem>>, %arg1: memref<768x1024xbf16, #tpu.memory_space<vmem>>, %arg2: memref<1x1024xf32, #tpu.memory_space<vmem>>, %arg3: memref<1x1024xf32, #tpu.memory_space<vmem>>) attributes {dimension_semantics = [], scalar_prefetch = 0 : i64, scratch_operands = 0 : i64, tpu.core_type = #tpu.core_type<tc>} {
    %c0 = arith.constant 0 : index
    %c0_0 = arith.constant 0 : index
    %0 = vector.load %arg0[%c0, %c0_0] : memref<1x768xbf16, #tpu.memory_space<vmem>>, vector<1x768xbf16>
    %c0_1 = arith.constant 0 : index
    %c0_2 = arith.constant 0 : index
    %1 = vector.load %arg1[%c0_1, %c0_2] : memref<768x1024xbf16, #tpu.memory_space<vmem>>, vector<768x1024xbf16>
    %cst = arith.constant dense<0.000000e+00> : vector<1x1024xf32>
    %2 = tpu.matmul %0, %1, %cst {dimension_numbers = #tpu.dot_dimension_numbers<[1], [0], [0], [1], [0, 0, 1, 1], [], []>} : vector<1x768xbf16>, vector<768x1024xbf16>, vector<1x1024xf32> -> vector<1x1024xf32>
    %c0_3 = arith.constant 0 : index
    %c0_4 = arith.constant 0 : index
    %3 = vector.load %arg2[%c0_3, %c0_4] : memref<1x1024xf32, #tpu.memory_space<vmem>>, vector<1x1024xf32>
    %4 = arith.addf %2, %3 : vector<1x1024xf32>
    %c0_5 = arith.constant 0 : index
    %c0_6 = arith.constant 0 : index
    %5 = vector.load %arg3[%c0_5, %c0_6] : memref<1x1024xf32, #tpu.memory_space<vmem>>, vector<1x1024xf32>
    tpu.vector_store %arg3[%c0_5, %c0_6], %4 {strides = array<i32>} : memref<1x1024xf32, #tpu.memory_space<vmem>>, vector<1x1024xf32>,
    return
  }
}

</mosaic_0001>

<llo_original>
// kernel: tpu_custom_call.1
$region0: #{tpu_custom_call.1}
  #allocation0 [shape = 'u32[]', space=smem, size = 0x4, offset = 0x4, fixed_abs, tag = 'smem constant byte address 0x4 - core index']
  #allocation1 [shape = 'u32[72,128]{1,0:T(1,128)}', space=vmem, size = 0x9000, scoped, tag = 'internal scratch']
  %s0 = inlined_call_operand.hbm [shape: bf16[1,768], index: 0, kind: input, shape index: {}]
  %s1 = inlined_call_operand.hbm [shape: bf16[768,1024], index: 1, kind: input, shape index: {}]
  %s2 = inlined_call_operand.hbm [shape: f32[1,1024], index: 2, kind: input, shape index: {}]
  %s3 = inlined_call_operand.hbm [shape: f32[1,1024], index: 3, kind: output, shape index: {}]
  %s4 = sld [smem:[#allocation0]]
  $region34: #{tpu_custom_call.1} parent=0
    _
  %s6 = ssub.s32 1, %s4
  %s7 = scalar_select 0, %s6, %s4
  $region1: #{tpu_custom_call.1} parent=0
    #allocation2 [shape = 'u8[3072]{0}', space=vmem, size = 0xc00, scoped, tag = 'input window, operand 0, single buffered']
    #allocation3 [shape = 's32[1]{0}', space=sflag, size = 0x4, scoped, tag = 'scoped memory for tpu_custom_call.1']
    #allocation4 [shape = 's32[1]{0}', space=sflag, size = 0x4, scoped, tag = 'scoped memory for tpu_custom_call.1']
    #allocation5 [shape = 'u8[1572864]{0}', space=vmem, size = 0x180000, scoped, tag = 'input window, operand 1, single buffered']
    #allocation6 [shape = 's32[1]{0}', space=sflag, size = 0x4, scoped, tag = 'scoped memory for tpu_custom_call.1']
    #allocation7 [shape = 'u8[4096]{0}', space=vmem, size = 0x1000, scoped, tag = 'input window, operand 2, single buffered']
    #allocation8 [shape = 'u8[4096]{0}', space=vmem, size = 0x1000, scoped, tag = 'output window, operand 0, single buffered']
    %8 = vsyncpa [#allocation3], 0
    %9 = vsyncpa [#allocation6], 0
    %10 = vsyncpa [#allocation4], 0
    // Predicated region
    $region2: #{tpu_custom_call.1} parent=1 // pred_check
      _
    $region3: #{tpu_custom_call.1} parent=1 // pred_check_branch
      %12 = sbr.rel (0) target = $region5
    $region4: #{tpu_custom_call.1} parent=1 // pred_region
      %14 = vsyncadd [#allocation3], 0
      %s16 = sshll.u32 %s0, 4
      %s17 = int_to_ptr.hbm [resolvable:$true] %s16
      %s18 = sshll.u32 [#allocation2], 4
      %s19 = int_to_ptr.vmem [resolvable:$true] %s18
      %21 = dma.hbm_to_vmem [thread:$0]  %s17, 96, %s19, [#allocation3]
    $region5: #{tpu_custom_call.1} parent=1 // pred_fallthru
      _
    // Predicated region
    $region6: #{tpu_custom_call.1} parent=1 // pred_check
      _
    $region7: #{tpu_custom_call.1} parent=1 // pred_check_branch
      %23 = sbr.rel (0) target = $region9
    $region8: #{tpu_custom_call.1} parent=1 // pred_region
      %25 = vsyncadd [#allocation6], 0
      %s26 = sshll.u32 %s1, 4
      %s27 = int_to_ptr.hbm [resolvable:$true] %s26
      %s28 = sshll.u32 [#allocation5], 4
      %s29 = int_to_ptr.vmem [resolvable:$true] %s28
      %34 = dma.hbm_to_vmem [thread:$0]  %s27, 49152, %s29, [#allocation6], 512, 512, 32
    $region9: #{tpu_custom_call.1} parent=1 // pred_fallthru
      _
    // Predicated region
    $region10: #{tpu_custom_call.1} parent=1 // pred_check
      _
    $region11: #{tpu_custom_call.1} parent=1 // pred_check_branch
      %36 = sbr.rel (0) target = $region13
    $region12: #{tpu_custom_call.1} parent=1 // pred_region
      %38 = vsyncadd [#allocation6], 0
      %s40 = sshll.u32 %s2, 4
      %s41 = int_to_ptr.hbm [resolvable:$true] %s40
      %s42 = sshll.u32 [#allocation7], 4
      %s43 = int_to_ptr.vmem [resolvable:$true] %s42
      %45 = dma.hbm_to_vmem [thread:$0]  %s41, 128, %s43, [#allocation6]
    $region13: #{tpu_custom_call.1} parent=1 // pred_fallthru
      _
    // Predicated region
    $region14: #{tpu_custom_call.1} parent=1 // pred_check
      _
    $region15: #{tpu_custom_call.1} parent=1 // pred_check_branch
      %47 = sbr.rel (0) target = $region17
    $region16: #{tpu_custom_call.1} parent=1 // pred_region
      %49 = dma.done [#allocation3], 96
    $region17: #{tpu_custom_call.1} parent=1 // pred_fallthru
      _
    // Predicated region
    $region18: #{tpu_custom_call.1} parent=1 // pred_check
      _
    $region19: #{tpu_custom_call.1} parent=1 // pred_check_branch
      %51 = sbr.rel (0) target = $region21
    $region20: #{tpu_custom_call.1} parent=1 // pred_region
      %53 = dma.done [#allocation6], 49152
    $region21: #{tpu_custom_call.1} parent=1 // pred_fallthru
      _
    // Predicated region
    $region22: #{tpu_custom_call.1} parent=1 // pred_check
      _
    $region23: #{tpu_custom_call.1} parent=1 // pred_check_branch
      %55 = sbr.rel (0) target = $region25
    $region24: #{tpu_custom_call.1} parent=1 // pred_region
      %57 = dma.done [#allocation6], 128
    $region25: #{tpu_custom_call.1} parent=1 // pred_fallthru
      _
    %v58 = vld [vmem:[#allocation2] sm:$0x3f]
    %v59 = vld [vmem:[#allocation5] sm:$0xff]
    %v60 = vld [vmem:[#allocation5 + $0x8] sm:$0xff]
    %v61 = vld [vmem:[#allocation5 + $0x10] sm:$0xff]
    %v62 = vld [vmem:[#allocation5 + $0x18] sm:$0xff]
    %v63 = vld [vmem:[#allocation5 + $0x20] sm:$0xff]
    %v64 = vld [vmem:[#allocation5 + $0x28] sm:$0xff]
    %v65 = vld [vmem:[#allocation5 + $0x30] sm:$0xff]
    %v66 = vld [vmem:[#allocation5 + $0x38] sm:$0xff]
    %v67 = vld [vmem:[#allocation5 + $0x40] sm:$0xff]
    %v68 = vld [vmem:[#allocation5 + $0x48] sm:$0xff]
    %v69 = vld [vmem:[#allocation5 + $0x50] sm:$0xff]
    %v70 = vld [vmem:[#allocation5 + $0x58] sm:$0xff]
    %v71 = vld [vmem:[#allocation5 + $0x60] sm:$0xff]
    %v72 = vld [vmem:[#allocation5 + $0x68] sm:$0xff]
    %v73 = vld [vmem:[#allocation5 + $0x70] sm:$0xff]
    %v74 = vld [vmem:[#allocation5 + $0x78] sm:$0xff]
    %v75 = vld [vmem:[#allocation5 + $0x80] sm:$0xff]
    %v76 = vld [vmem:[#allocation5 + $0x88] sm:$0xff]
    %v77 = vld [vmem:[#allocation5 + $0x90] sm:$0xff]
    %v78 = vld [vmem:[#allocation5 + $0x98] sm:$0xff]
    %v79 = vld [vmem:[#allocation5 + $0xa0] sm:$0xff]
    %v80 = vld [vmem:[#allocation5 + $0xa8] sm:$0xff]
    %v81 = vld [vmem:[#allocation5 + $0xb0] sm:$0xff]
    %v82 = vld [vmem:[#allocation5 + $0xb8] sm:$0xff]
    %v83 = vld [vmem:[#allocation5 + $0xc0] sm:$0xff]
    %v84 = vld [vmem:[#allocation5 + $0xc8] sm:$0xff]
    %v85 = vld [vmem:[#allocation5 + $0xd0] sm:$0xff]
    %v86 = vld [vmem:[#allocation5 + $0xd8] sm:$0xff]
    %v87 = vld [vmem:[#allocation5 + $0xe0] sm:$0xff]
    %v88 = vld [vmem:[#allocation5 + $0xe8] sm:$0xff]
    %v89 = vld [vmem:[#allocation5 + $0xf0] sm:$0xff]
    %v90 = vld [vmem:[#allocation5 + $0xf8] sm:$0xff]
    %v91 = vld [vmem:[#allocation5 + $0x100] sm:$0xff]
    %v92 = vld [vmem:[#allocation5 + $0x108] sm:$0xff]
    %v93 = vld [vmem:[#allocation5 + $0x110] sm:$0xff]
    %v94 = vld [vmem:[#allocation5 + $0x118] sm:$0xff]
    %v95 = vld [vmem:[#allocation5 + $0x120] sm:$0xff]
    %v96 = vld [vmem:[#allocation5 + $0x128] sm:$0xff]
    %v97 = vld [vmem:[#allocation5 + $0x130] sm:$0xff]
    %v98 = vld [vmem:[#allocation5 + $0x138] sm:$0xff]
    %v99 = vld [vmem:[#allocation5 + $0x140] sm:$0xff]
    %v100 = vld [vmem:[#allocation5 + $0x148] sm:$0xff]
    %v101 = vld [vmem:[#allocation5 + $0x150] sm:$0xff]
    %v102 = vld [vmem:[#allocation5 + $0x158] sm:$0xff]
    %v103 = vld [vmem:[#allocation5 + $0x160] sm:$0xff]
    %v104 = vld [vmem:[#allocation5 + $0x168] sm:$0xff]
    %v105 = vld [vmem:[#allocation5 + $0x170] sm:$0xff]
    %v106 = vld [vmem:[#allocation5 + $0x178] sm:$0xff]
    %v107 = vld [vmem:[#allocation5 + $0x180] sm:$0xff]
    %v108 = vld [vmem:[#allocation5 + $0x188] sm:$0xff]
    %v109 = vld [vmem:[#allocation5 + $0x190] sm:$0xff]
    %v110 = vld [vmem:[#allocation5 + $0x198] sm:$0xff]
    %v111 = vld [vmem:[#allocation5 + $0x1a0] sm:$0xff]
    %v112 = vld [vmem:[#allocation5 + $0x1a8] sm:$0xff]
    %v113 = vld [vmem:[#allocation5 + $0x1b0] sm:$0xff]
    %v114 = vld [vmem:[#allocation5 + $0x1b8] sm:$0xff]
    %v115 = vld [vmem:[#allocation5 + $0x1c0] sm:$0xff]
    %v116 = vld [vmem:[#allocation5 + $0x1c8] sm:$0xff]
    %v117 = vld [vmem:[#allocation5 + $0x1d0] sm:$0xff]
    %v118 = vld [vmem:[#allocation5 + $0x1d8] sm:$0xff]
    %v119 = vld [vmem:[#allocation5 + $0x1e0] sm:$0xff]
    %v120 = vld [vmem:[#allocation5 + $0x1e8] sm:$0xff]
    %v121 = vld [vmem:[#allocation5 + $0x1f0] sm:$0xff]
    %v122 = vld [vmem:[#allocation5 + $0x1f8] sm:$0xff]
    %v123 = vld [vmem:[#allocation5 + $0x200] sm:$0xff]
    %v124 = vld [vmem:[#allocation5 + $0x208] sm:$0xff]
    %v125 = vld [vmem:[#allocation5 + $0x210] sm:$0xff]
    %v126 = vld [vmem:[#allocation5 + $0x218] sm:$0xff]
    %v127 = vld [vmem:[#allocation5 + $0x220] sm:$0xff]
    %v128 = vld [vmem:[#allocation5 + $0x228] sm:$0xff]
    %v129 = vld [vmem:[#allocation5 + $0x230] sm:$0xff]
    %v130 = vld [vmem:[#allocation5 + $0x238] sm:$0xff]
    %v131 = vld [vmem:[#allocation5 + $0x240] sm:$0xff]
    %v132 = vld [vmem:[#allocation5 + $0x248] sm:$0xff]
    %v133 = vld [vmem:[#allocation5 + $0x250] sm:$0xff]
    %v134 = vld [vmem:[#allocation5 + $0x258] sm:$0xff]
    %v135 = vld [vmem:[#allocation5 + $0x260] sm:$0xff]
    %v136 = vld [vmem:[#allocation5 + $0x268] sm:$0xff]
    %v137 = vld [vmem:[#allocation5 + $0x270] sm:$0xff]
    %v138 = vld [vmem:[#allocation5 + $0x278] sm:$0xff]
    %v139 = vld [vmem:[#allocation5 + $0x280] sm:$0xff]
    %v140 = vld [vmem:[#allocation5 + $0x288] sm:$0xff]
    %v141 = vld [vmem:[#allocation5 + $0x290] sm:$0xff]
    %v142 = vld [vmem:[#allocation5 + $0x298] sm:$0xff]
    %v143 = vld [vmem:[#allocation5 + $0x2a0] sm:$0xff]
    %v144 = vld [vmem:[#allocation5 + $0x2a8] sm:$0xff]
    %v145 = vld [vmem:[#allocation5 + $0x2b0] sm:$0xff]
    %v146 = vld [vmem:[#allocation5 + $0x2b8] sm:$0xff]
    %v147 = vld [vmem:[#allocation5 + $0x2c0] sm:$0xff]
    %v148 = vld [vmem:[#allocation5 + $0x2c8] sm:$0xff]
    %v149 = vld [vmem:[#allocation5 + $0x2d0] sm:$0xff]
    %v150 = vld [vmem:[#allocation5 + $0x2d8] sm:$0xff]
    %v151 = vld [vmem:[#allocation5 + $0x2e0] sm:$0xff]
    %v152 = vld [vmem:[#allocation5 + $0x2e8] sm:$0xff]
    %v153 = vld [vmem:[#allocation5 + $0x2f0] sm:$0xff]
    %v154 = vld [vmem:[#allocation5 + $0x2f8] sm:$0xff]
    %v155 = vld [vmem:[#allocation5 + $0x300] sm:$0xff]
    %v156 = vld [vmem:[#allocation5 + $0x308] sm:$0xff]
    %v157 = vld [vmem:[#allocation5 + $0x310] sm:$0xff]
    %v158 = vld [vmem:[#allocation5 + $0x318] sm:$0xff]
    %v159 = vld [vmem:[#allocation5 + $0x320] sm:$0xff]
    %v160 = vld [vmem:[#allocation5 + $0x328] sm:$0xff]
    %v161 = vld [vmem:[#allocation5 + $0x330] sm:$0xff]
    %v162 = vld [vmem:[#allocation5 + $0x338] sm:$0xff]
    %v163 = vld [vmem:[#allocation5 + $0x340] sm:$0xff]
    %v164 = vld [vmem:[#allocation5 + $0x348] sm:$0xff]
    %v165 = vld [vmem:[#allocation5 + $0x350] sm:$0xff]
    %v166 = vld [vmem:[#allocation5 + $0x358] sm:$0xff]
    %v167 = vld [vmem:[#allocation5 + $0x360] sm:$0xff]
    %v168 = vld [vmem:[#allocation5 + $0x368] sm:$0xff]
    %v169 = vld [vmem:[#allocation5 + $0x370] sm:$0xff]
    %v170 = vld [vmem:[#allocation5 + $0x378] sm:$0xff]
    %v171 = vld [vmem:[#allocation5 + $0x380] sm:$0xff]
    %v172 = vld [vmem:[#allocation5 + $0x388] sm:$0xff]
    %v173 = vld [vmem:[#allocation5 + $0x390] sm:$0xff]
    %v174 = vld [vmem:[#allocation5 + $0x398] sm:$0xff]
    %v175 = vld [vmem:[#allocation5 + $0x3a0] sm:$0xff]
    %v176 = vld [vmem:[#allocation5 + $0x3a8] sm:$0xff]
    %v177 = vld [vmem:[#allocation5 + $0x3b0] sm:$0xff]
    %v178 = vld [vmem:[#allocation5 + $0x3b8] sm:$0xff]
    %v179 = vld [vmem:[#allocation5 + $0x3c0] sm:$0xff]
    %v180 = vld [vmem:[#allocation5 + $0x3c8] sm:$0xff]
    %v181 = vld [vmem:[#allocation5 + $0x3d0] sm:$0xff]
    %v182 = vld [vmem:[#allocation5 + $0x3d8] sm:$0xff]
    %v183 = vld [vmem:[#allocation5 + $0x3e0] sm:$0xff]
    %v184 = vld [vmem:[#allocation5 + $0x3e8] sm:$0xff]
    %v185 = vld [vmem:[#allocation5 + $0x3f0] sm:$0xff]
    %v186 = vld [vmem:[#allocation5 + $0x3f8] sm:$0xff]
    %v187 = vld [vmem:[#allocation5 + $0x400] sm:$0xff]
    %v188 = vld [vmem:[#allocation5 + $0x408] sm:$0xff]
    %v189 = vld [vmem:[#allocation5 + $0x410] sm:$0xff]
    %v190 = vld [vmem:[#allocation5 + $0x418] sm:$0xff]
    %v191 = vld [vmem:[#allocation5 + $0x420] sm:$0xff]
    %v192 = vld [vmem:[#allocation5 + $0x428] sm:$0xff]
    %v193 = vld [vmem:[#allocation5 + $0x430] sm:$0xff]
    %v194 = vld [vmem:[#allocation5 + $0x438] sm:$0xff]
    %v195 = vld [vmem:[#allocation5 + $0x440] sm:$0xff]
    %v196 = vld [vmem:[#allocation5 + $0x448] sm:$0xff]
    %v197 = vld [vmem:[#allocation5 + $0x450] sm:$0xff]
    %v198 = vld [vmem:[#allocation5 + $0x458] sm:$0xff]
    %v199 = vld [vmem:[#allocation5 + $0x460] sm:$0xff]
    %v200 = vld [vmem:[#allocation5 + $0x468] sm:$0xff]
    %v201 = vld [vmem:[#allocation5 + $0x470] sm:$0xff]
    %v202 = vld [vmem:[#allocation5 + $0x478] sm:$0xff]
    %v203 = vld [vmem:[#allocation5 + $0x480] sm:$0xff]
    %v204 = vld [vmem:[#allocation5 + $0x488] sm:$0xff]
    %v205 = vld [vmem:[#allocation5 + $0x490] sm:$0xff]
    %v206 = vld [vmem:[#allocation5 + $0x498] sm:$0xff]
    %v207 = vld [vmem:[#allocation5 + $0x4a0] sm:$0xff]
    %v208 = vld [vmem:[#allocation5 + $0x4a8] sm:$0xff]
    %v209 = vld [vmem:[#allocation5 + $0x4b0] sm:$0xff]
    %v210 = vld [vmem:[#allocation5 + $0x4b8] sm:$0xff]
    %v211 = vld [vmem:[#allocation5 + $0x4c0] sm:$0xff]
    %v212 = vld [vmem:[#allocation5 + $0x4c8] sm:$0xff]
    %v213 = vld [vmem:[#allocation5 + $0x4d0] sm:$0xff]
    %v214 = vld [vmem:[#allocation5 + $0x4d8] sm:$0xff]
    %v215 = vld [vmem:[#allocation5 + $0x4e0] sm:$0xff]
    %v216 = vld [vmem:[#allocation5 + $0x4e8] sm:$0xff]
    %v217 = vld [vmem:[#allocation5 + $0x4f0] sm:$0xff]
    %v218 = vld [vmem:[#allocation5 + $0x4f8] sm:$0xff]
    %v219 = vld [vmem:[#allocation5 + $0x500] sm:$0xff]
    %v220 = vld [vmem:[#allocation5 + $0x508] sm:$0xff]
    %v221 = vld [vmem:[#allocation5 + $0x510] sm:$0xff]
    %v222 = vld [vmem:[#allocation5 + $0x518] sm:$0xff]
    %v223 = vld [vmem:[#allocation5 + $0x520] sm:$0xff]
    %v224 = vld [vmem:[#allocation5 + $0x528] sm:$0xff]
    %v225 = vld [vmem:[#allocation5 + $0x530] sm:$0xff]
    %v226 = vld [vmem:[#allocation5 + $0x538] sm:$0xff]
    %v227 = vld [vmem:[#allocation5 + $0x540] sm:$0xff]
    %v228 = vld [vmem:[#allocation5 + $0x548] sm:$0xff]
    %v229 = vld [vmem:[#allocation5 + $0x550] sm:$0xff]
    %v230 = vld [vmem:[#allocation5 + $0x558] sm:$0xff]
    %v231 = vld [vmem:[#allocation5 + $0x560] sm:$0xff]
    %v232 = vld [vmem:[#allocation5 + $0x568] sm:$0xff]
    %v233 = vld [vmem:[#allocation5 + $0x570] sm:$0xff]
    %v234 = vld [vmem:[#allocation5 + $0x578] sm:$0xff]
    %v235 = vld [vmem:[#allocation5 + $0x580] sm:$0xff]
    %v236 = vld [vmem:[#allocation5 + $0x588] sm:$0xff]
    %v237 = vld [vmem:[#allocation5 + $0x590] sm:$0xff]
    %v238 = vld [vmem:[#allocation5 + $0x598] sm:$0xff]
    %v239 = vld [vmem:[#allocation5 + $0x5a0] sm:$0xff]
    %v240 = vld [vmem:[#allocation5 + $0x5a8] sm:$0xff]
    %v241 = vld [vmem:[#allocation5 + $0x5b0] sm:$0xff]
    %v242 = vld [vmem:[#allocation5 + $0x5b8] sm:$0xff]
    %v243 = vld [vmem:[#allocation5 + $0x5c0] sm:$0xff]
    %v244 = vld [vmem:[#allocation5 + $0x5c8] sm:$0xff]
    %v245 = vld [vmem:[#allocation5 + $0x5d0] sm:$0xff]
    %v246 = vld [vmem:[#allocation5 + $0x5d8] sm:$0xff]
    %v247 = vld [vmem:[#allocation5 + $0x5e0] sm:$0xff]
    %v248 = vld [vmem:[#allocation5 + $0x5e8] sm:$0xff]
    %v249 = vld [vmem:[#allocation5 + $0x5f0] sm:$0xff]
    %v250 = vld [vmem:[#allocation5 + $0x5f8] sm:$0xff]
    %v251 = vld [vmem:[#allocation5 + $0x600] sm:$0xff]
    %v252 = vld [vmem:[#allocation5 + $0x608] sm:$0xff]
    %v253 = vld [vmem:[#allocation5 + $0x610] sm:$0xff]
    %v254 = vld [vmem:[#allocation5 + $0x618] sm:$0xff]
    %v255 = vld [vmem:[#allocation5 + $0x620] sm:$0xff]
    %v256 = vld [vmem:[#allocation5 + $0x628] sm:$0xff]
    %v257 = vld [vmem:[#allocation5 + $0x630] sm:$0xff]
    %v258 = vld [vmem:[#allocation5 + $0x638] sm:$0xff]
    %v259 = vld [vmem:[#allocation5 + $0x640] sm:$0xff]
    %v260 = vld [vmem:[#allocation5 + $0x648] sm:$0xff]
    %v261 = vld [vmem:[#allocation5 + $0x650] sm:$0xff]
    %v262 = vld [vmem:[#allocation5 + $0x658] sm:$0xff]
    %v263 = vld [vmem:[#allocation5 + $0x660] sm:$0xff]
    %v264 = vld [vmem:[#allocation5 + $0x668] sm:$0xff]
    %v265 = vld [vmem:[#allocation5 + $0x670] sm:$0xff]
    %v266 = vld [vmem:[#allocation5 + $0x678] sm:$0xff]
    %v267 = vld [vmem:[#allocation5 + $0x680] sm:$0xff]
    %v268 = vld [vmem:[#allocation5 + $0x688] sm:$0xff]
    %v269 = vld [vmem:[#allocation5 + $0x690] sm:$0xff]
    %v270 = vld [vmem:[#allocation5 + $0x698] sm:$0xff]
    %v271 = vld [vmem:[#allocation5 + $0x6a0] sm:$0xff]
    %v272 = vld [vmem:[#allocation5 + $0x6a8] sm:$0xff]
    %v273 = vld [vmem:[#allocation5 + $0x6b0] sm:$0xff]
    %v274 = vld [vmem:[#allocation5 + $0x6b8] sm:$0xff]
    %v275 = vld [vmem:[#allocation5 + $0x6c0] sm:$0xff]
    %v276 = vld [vmem:[#allocation5 + $0x6c8] sm:$0xff]
    %v277 = vld [vmem:[#allocation5 + $0x6d0] sm:$0xff]
    %v278 = vld [vmem:[#allocation5 + $0x6d8] sm:$0xff]
    %v279 = vld [vmem:[#allocation5 + $0x6e0] sm:$0xff]
    %v280 = vld [vmem:[#allocation5 + $0x6e8] sm:$0xff]
    %v281 = vld [vmem:[#allocation5 + $0x6f0] sm:$0xff]
    %v282 = vld [vmem:[#allocation5 + $0x6f8] sm:$0xff]
    %v283 = vld [vmem:[#allocation5 + $0x700] sm:$0xff]
    %v284 = vld [vmem:[#allocation5 + $0x708] sm:$0xff]
    %v285 = vld [vmem:[#allocation5 + $0x710] sm:$0xff]
    %v286 = vld [vmem:[#allocation5 + $0x718] sm:$0xff]
    %v287 = vld [vmem:[#allocation5 + $0x720] sm:$0xff]
    %v288 = vld [vmem:[#allocation5 + $0x728] sm:$0xff]
    %v289 = vld [vmem:[#allocation5 + $0x730] sm:$0xff]
    %v290 = vld [vmem:[#allocation5 + $0x738] sm:$0xff]
    %v291 = vld [vmem:[#allocation5 + $0x740] sm:$0xff]
    %v292 = vld [vmem:[#allocation5 + $0x748] sm:$0xff]
    %v293 = vld [vmem:[#allocation5 + $0x750] sm:$0xff]
    %v294 = vld [vmem:[#allocation5 + $0x758] sm:$0xff]
    %v295 = vld [vmem:[#allocation5 + $0x760] sm:$0xff]
    %v296 = vld [vmem:[#allocation5 + $0x768] sm:$0xff]
    %v297 = vld [vmem:[#allocation5 + $0x770] sm:$0xff]
    %v298 = vld [vmem:[#allocation5 + $0x778] sm:$0xff]
    %v299 = vld [vmem:[#allocation5 + $0x780] sm:$0xff]
    %v300 = vld [vmem:[#allocation5 + $0x788] sm:$0xff]
    %v301 = vld [vmem:[#allocation5 + $0x790] sm:$0xff]
    %v302 = vld [vmem:[#allocation5 + $0x798] sm:$0xff]
    %v303 = vld [vmem:[#allocation5 + $0x7a0] sm:$0xff]
    %v304 = vld [vmem:[#allocation5 + $0x7a8] sm:$0xff]
    %v305 = vld [vmem:[#allocation5 + $0x7b0] sm:$0xff]
    %v306 = vld [vmem:[#allocation5 + $0x7b8] sm:$0xff]
    %v307 = vld [vmem:[#allocation5 + $0x7c0] sm:$0xff]
    %v308 = vld [vmem:[#allocation5 + $0x7c8] sm:$0xff]
    %v309 = vld [vmem:[#allocation5 + $0x7d0] sm:$0xff]
    %v310 = vld [vmem:[#allocation5 + $0x7d8] sm:$0xff]
    %v311 = vld [vmem:[#allocation5 + $0x7e0] sm:$0xff]
    %v312 = vld [vmem:[#allocation5 + $0x7e8] sm:$0xff]
    %v313 = vld [vmem:[#allocation5 + $0x7f0] sm:$0xff]
    %v314 = vld [vmem:[#allocation5 + $0x7f8] sm:$0xff]
    %v315 = vld [vmem:[#allocation5 + $0x800] sm:$0xff]
    %v316 = vld [vmem:[#allocation5 + $0x808] sm:$0xff]
    %v317 = vld [vmem:[#allocation5 + $0x810] sm:$0xff]
    %v318 = vld [vmem:[#allocation5 + $0x818] sm:$0xff]
    %v319 = vld [vmem:[#allocation5 + $0x820] sm:$0xff]
    %v320 = vld [vmem:[#allocation5 + $0x828] sm:$0xff]
    %v321 = vld [vmem:[#allocation5 + $0x830] sm:$0xff]
    %v322 = vld [vmem:[#allocation5 + $0x838] sm:$0xff]
    %v323 = vld [vmem:[#allocation5 + $0x840] sm:$0xff]
    %v324 = vld [vmem:[#allocation5 + $0x848] sm:$0xff]
    %v325 = vld [vmem:[#allocation5 + $0x850] sm:$0xff]
    %v326 = vld [vmem:[#allocation5 + $0x858] sm:$0xff]
    %v327 = vld [vmem:[#allocation5 + $0x860] sm:$0xff]
    %v328 = vld [vmem:[#allocation5 + $0x868] sm:$0xff]
    %v329 = vld [vmem:[#allocation5 + $0x870] sm:$0xff]
    %v330 = vld [vmem:[#allocation5 + $0x878] sm:$0xff]
    %v331 = vld [vmem:[#allocation5 + $0x880] sm:$0xff]
    %v332 = vld [vmem:[#allocation5 + $0x888] sm:$0xff]
    %v333 = vld [vmem:[#allocation5 + $0x890] sm:$0xff]
    %v334 = vld [vmem:[#allocation5 + $0x898] sm:$0xff]
    %v335 = vld [vmem:[#allocation5 + $0x8a0] sm:$0xff]
    %v336 = vld [vmem:[#allocation5 + $0x8a8] sm:$0xff]
    %v337 = vld [vmem:[#allocation5 + $0x8b0] sm:$0xff]
    %v338 = vld [vmem:[#allocation5 + $0x8b8] sm:$0xff]
    %v339 = vld [vmem:[#allocation5 + $0x8c0] sm:$0xff]
    %v340 = vld [vmem:[#allocation5 + $0x8c8] sm:$0xff]
    %v341 = vld [vmem:[#allocation5 + $0x8d0] sm:$0xff]
    %v342 = vld [vmem:[#allocation5 + $0x8d8] sm:$0xff]
    %v343 = vld [vmem:[#allocation5 + $0x8e0] sm:$0xff]
    %v344 = vld [vmem:[#allocation5 + $0x8e8] sm:$0xff]
    %v345 = vld [vmem:[#allocation5 + $0x8f0] sm:$0xff]
    %v346 = vld [vmem:[#allocation5 + $0x8f8] sm:$0xff]
    %v347 = vld [vmem:[#allocation5 + $0x900] sm:$0xff]
    %v348 = vld [vmem:[#allocation5 + $0x908] sm:$0xff]
    %v349 = vld [vmem:[#allocation5 + $0x910] sm:$0xff]
    %v350 = vld [vmem:[#allocation5 + $0x918] sm:$0xff]
    %v351 = vld [vmem:[#allocation5 + $0x920] sm:$0xff]
    %v352 = vld [vmem:[#allocation5 + $0x928] sm:$0xff]
    %v353 = vld [vmem:[#allocation5 + $0x930] sm:$0xff]
    %v354 = vld [vmem:[#allocation5 + $0x938] sm:$0xff]
    %v355 = vld [vmem:[#allocation5 + $0x940] sm:$0xff]
    %v356 = vld [vmem:[#allocation5 + $0x948] sm:$0xff]
    %v357 = vld [vmem:[#allocation5 + $0x950] sm:$0xff]
    %v358 = vld [vmem:[#allocation5 + $0x958] sm:$0xff]
    %v359 = vld [vmem:[#allocation5 + $0x960] sm:$0xff]
    %v360 = vld [vmem:[#allocation5 + $0x968] sm:$0xff]
    %v361 = vld [vmem:[#allocation5 + $0x970] sm:$0xff]
    %v362 = vld [vmem:[#allocation5 + $0x978] sm:$0xff]
    %v363 = vld [vmem:[#allocation5 + $0x980] sm:$0xff]
    %v364 = vld [vmem:[#allocation5 + $0x988] sm:$0xff]
    %v365 = vld [vmem:[#allocation5 + $0x990] sm:$0xff]
    %v366 = vld [vmem:[#allocation5 + $0x998] sm:$0xff]
    %v367 = vld [vmem:[#allocation5 + $0x9a0] sm:$0xff]
    %v368 = vld [vmem:[#allocation5 + $0x9a8] sm:$0xff]
    %v369 = vld [vmem:[#allocation5 + $0x9b0] sm:$0xff]
    %v370 = vld [vmem:[#allocation5 + $0x9b8] sm:$0xff]
    %v371 = vld [vmem:[#allocation5 + $0x9c0] sm:$0xff]
    %v372 = vld [vmem:[#allocation5 + $0x9c8] sm:$0xff]
    %v373 = vld [vmem:[#allocation5 + $0x9d0] sm:$0xff]
    %v374 = vld [vmem:[#allocation5 + $0x9d8] sm:$0xff]
    %v375 = vld [vmem:[#allocation5 + $0x9e0] sm:$0xff]
    %v376 = vld [vmem:[#allocation5 + $0x9e8] sm:$0xff]
    %v377 = vld [vmem:[#allocation5 + $0x9f0] sm:$0xff]
    %v378 = vld [vmem:[#allocation5 + $0x9f8] sm:$0xff]
    %v379 = vld [vmem:[#allocation5 + $0xa00] sm:$0xff]
    %v380 = vld [vmem:[#allocation5 + $0xa08] sm:$0xff]
    %v381 = vld [vmem:[#allocation5 + $0xa10] sm:$0xff]
    %v382 = vld [vmem:[#allocation5 + $0xa18] sm:$0xff]
    %v383 = vld [vmem:[#allocation5 + $0xa20] sm:$0xff]
    %v384 = vld [vmem:[#allocation5 + $0xa28] sm:$0xff]
    %v385 = vld [vmem:[#allocation5 + $0xa30] sm:$0xff]
    %v386 = vld [vmem:[#allocation5 + $0xa38] sm:$0xff]
    %v387 = vld [vmem:[#allocation5 + $0xa40] sm:$0xff]
    %v388 = vld [vmem:[#allocation5 + $0xa48] sm:$0xff]
    %v389 = vld [vmem:[#allocation5 + $0xa50] sm:$0xff]
    %v390 = vld [vmem:[#allocation5 + $0xa58] sm:$0xff]
    %v391 = vld [vmem:[#allocation5 + $0xa60] sm:$0xff]
    %v392 = vld [vmem:[#allocation5 + $0xa68] sm:$0xff]
    %v393 = vld [vmem:[#allocation5 + $0xa70] sm:$0xff]
    %v394 = vld [vmem:[#allocation5 + $0xa78] sm:$0xff]
    %v395 = vld [vmem:[#allocation5 + $0xa80] sm:$0xff]
    %v396 = vld [vmem:[#allocation5 + $0xa88] sm:$0xff]
    %v397 = vld [vmem:[#allocation5 + $0xa90] sm:$0xff]
    %v398 = vld [vmem:[#allocation5 + $0xa98] sm:$0xff]
    %v399 = vld [vmem:[#allocation5 + $0xaa0] sm:$0xff]
    %v400 = vld [vmem:[#allocation5 + $0xaa8] sm:$0xff]
    %v401 = vld [vmem:[#allocation5 + $0xab0] sm:$0xff]
    %v402 = vld [vmem:[#allocation5 + $0xab8] sm:$0xff]
    %v403 = vld [vmem:[#allocation5 + $0xac0] sm:$0xff]
    %v404 = vld [vmem:[#allocation5 + $0xac8] sm:$0xff]
    %v405 = vld [vmem:[#allocation5 + $0xad0] sm:$0xff]
    %v406 = vld [vmem:[#allocation5 + $0xad8] sm:$0xff]
    %v407 = vld [vmem:[#allocation5 + $0xae0] sm:$0xff]
    %v408 = vld [vmem:[#allocation5 + $0xae8] sm:$0xff]
    %v409 = vld [vmem:[#allocation5 + $0xaf0] sm:$0xff]
    %v410 = vld [vmem:[#allocation5 + $0xaf8] sm:$0xff]
    %v411 = vld [vmem:[#allocation5 + $0xb00] sm:$0xff]
    %v412 = vld [vmem:[#allocation5 + $0xb08] sm:$0xff]
    %v413 = vld [vmem:[#allocation5 + $0xb10] sm:$0xff]
    %v414 = vld [vmem:[#allocation5 + $0xb18] sm:$0xff]
    %v415 = vld [vmem:[#allocation5 + $0xb20] sm:$0xff]
    %v416 = vld [vmem:[#allocation5 + $0xb28] sm:$0xff]
    %v417 = vld [vmem:[#allocation5 + $0xb30] sm:$0xff]
    %v418 = vld [vmem:[#allocation5 + $0xb38] sm:$0xff]
    %v419 = vld [vmem:[#allocation5 + $0xb40] sm:$0xff]
    %v420 = vld [vmem:[#allocation5 + $0xb48] sm:$0xff]
    %v421 = vld [vmem:[#allocation5 + $0xb50] sm:$0xff]
    %v422 = vld [vmem:[#allocation5 + $0xb58] sm:$0xff]
    %v423 = vld [vmem:[#allocation5 + $0xb60] sm:$0xff]
    %v424 = vld [vmem:[#allocation5 + $0xb68] sm:$0xff]
    %v425 = vld [vmem:[#allocation5 + $0xb70] sm:$0xff]
    %v426 = vld [vmem:[#allocation5 + $0xb78] sm:$0xff]
    %v427 = vld [vmem:[#allocation5 + $0xb80] sm:$0xff]
    %v428 = vld [vmem:[#allocation5 + $0xb88] sm:$0xff]
    %v429 = vld [vmem:[#allocation5 + $0xb90] sm:$0xff]
    %v430 = vld [vmem:[#allocation5 + $0xb98] sm:$0xff]
    %v431 = vld [vmem:[#allocation5 + $0xba0] sm:$0xff]
    %v432 = vld [vmem:[#allocation5 + $0xba8] sm:$0xff]
    %v433 = vld [vmem:[#allocation5 + $0xbb0] sm:$0xff]
    %v434 = vld [vmem:[#allocation5 + $0xbb8] sm:$0xff]
    %v435 = vld [vmem:[#allocation5 + $0xbc0] sm:$0xff]
    %v436 = vld [vmem:[#allocation5 + $0xbc8] sm:$0xff]
    %v437 = vld [vmem:[#allocation5 + $0xbd0] sm:$0xff]
    %v438 = vld [vmem:[#allocation5 + $0xbd8] sm:$0xff]
    %v439 = vld [vmem:[#allocation5 + $0xbe0] sm:$0xff]
    %v440 = vld [vmem:[#allocation5 + $0xbe8] sm:$0xff]
    %v441 = vld [vmem:[#allocation5 + $0xbf0] sm:$0xff]
    %v442 = vld [vmem:[#allocation5 + $0xbf8] sm:$0xff]
    %v443 = vld [vmem:[#allocation7] sm:$0xff]
    %445 = vst [vmem:[#allocation1] ss:$9 sm:$0xff] %v58
    %v446 = vld [vmem:[#allocation1] sm:$0xff]
    %v447 = vld [vmem:[#allocation1 + $0x9] sm:$0xff]
    %v448 = vld [vmem:[#allocation1 + $0x12] sm:$0xff]
    %v449 = vld [vmem:[#allocation1 + $0x1b] sm:$0xff]
    %v450 = vld [vmem:[#allocation1 + $0x24] sm:$0xff]
    %v451 = vld [vmem:[#allocation1 + $0x2d] sm:$0xff]
    %v842 = vunpack.c.l.b16 %v59
    %v843 = vunpack.c.h.b16 %v59
    %v844 = vunpack.c.l.b16 %v60
    %v845 = vunpack.c.h.b16 %v60
    %v846 = vunpack.c.l.b16 %v61
    %v847 = vunpack.c.h.b16 %v61
    %v848 = vunpack.c.l.b16 %v62
    %v849 = vunpack.c.h.b16 %v62
    %v850 = vunpack.c.l.b16 %v63
    %v851 = vunpack.c.h.b16 %v63
    %v852 = vunpack.c.l.b16 %v64
    %v853 = vunpack.c.h.b16 %v64
    %v854 = vunpack.c.l.b16 %v65
    %v855 = vunpack.c.h.b16 %v65
    %v856 = vunpack.c.l.b16 %v66
    %v857 = vunpack.c.h.b16 %v66
    %v858 = vunpack.c.l.b16 %v67
    %v859 = vunpack.c.h.b16 %v67
    %v860 = vunpack.c.l.b16 %v68
    %v861 = vunpack.c.h.b16 %v68
    %v862 = vunpack.c.l.b16 %v69
    %v863 = vunpack.c.h.b16 %v69
    %v864 = vunpack.c.l.b16 %v70
    %v865 = vunpack.c.h.b16 %v70
    %v866 = vunpack.c.l.b16 %v71
    %v867 = vunpack.c.h.b16 %v71
    %v868 = vunpack.c.l.b16 %v72
    %v869 = vunpack.c.h.b16 %v72
    %v870 = vunpack.c.l.b16 %v73
    %v871 = vunpack.c.h.b16 %v73
    %v872 = vunpack.c.l.b16 %v74
    %v873 = vunpack.c.h.b16 %v74
    %v874 = vunpack.c.l.b16 %v75
    %v875 = vunpack.c.h.b16 %v75
    %v876 = vunpack.c.l.b16 %v76
    %v877 = vunpack.c.h.b16 %v76
    %v878 = vunpack.c.l.b16 %v77
    %v879 = vunpack.c.h.b16 %v77
    %v880 = vunpack.c.l.b16 %v78
    %v881 = vunpack.c.h.b16 %v78
    %v882 = vunpack.c.l.b16 %v79
    %v883 = vunpack.c.h.b16 %v79
    %v884 = vunpack.c.l.b16 %v80
    %v885 = vunpack.c.h.b16 %v80
    %v886 = vunpack.c.l.b16 %v81
    %v887 = vunpack.c.h.b16 %v81
    %v888 = vunpack.c.l.b16 %v82
    %v889 = vunpack.c.h.b16 %v82
    %v890 = vunpack.c.l.b16 %v83
    %v891 = vunpack.c.h.b16 %v83
    %v892 = vunpack.c.l.b16 %v84
    %v893 = vunpack.c.h.b16 %v84
    %v894 = vunpack.c.l.b16 %v85
    %v895 = vunpack.c.h.b16 %v85
    %v896 = vunpack.c.l.b16 %v86
    %v897 = vunpack.c.h.b16 %v86
    %v898 = vunpack.c.l.b16 %v87
    %v899 = vunpack.c.h.b16 %v87
    %v900 = vunpack.c.l.b16 %v88
    %v901 = vunpack.c.h.b16 %v88
    %v902 = vunpack.c.l.b16 %v89
    %v903 = vunpack.c.h.b16 %v89
    %v904 = vunpack.c.l.b16 %v90
    %v905 = vunpack.c.h.b16 %v90
    %v906 = vunpack.c.l.b16 %v91
    %v907 = vunpack.c.h.b16 %v91
    %v908 = vunpack.c.l.b16 %v92
    %v909 = vunpack.c.h.b16 %v92
    %v910 = vunpack.c.l.b16 %v93
    %v911 = vunpack.c.h.b16 %v93
    %v912 = vunpack.c.l.b16 %v94
    %v913 = vunpack.c.h.b16 %v94
    %v914 = vunpack.c.l.b16 %v95
    %v915 = vunpack.c.h.b16 %v95
    %v916 = vunpack.c.l.b16 %v96
    %v917 = vunpack.c.h.b16 %v96
    %v918 = vunpack.c.l.b16 %v97
    %v919 = vunpack.c.h.b16 %v97
    %v920 = vunpack.c.l.b16 %v98
    %v921 = vunpack.c.h.b16 %v98
    %v922 = vunpack.c.l.b16 %v99
    %v923 = vunpack.c.h.b16 %v99
    %v924 = vunpack.c.l.b16 %v100
    %v925 = vunpack.c.h.b16 %v100
    %v926 = vunpack.c.l.b16 %v101
    %v927 = vunpack.c.h.b16 %v101
    %v928 = vunpack.c.l.b16 %v102
    %v929 = vunpack.c.h.b16 %v102
    %v930 = vunpack.c.l.b16 %v103
    %v931 = vunpack.c.h.b16 %v103
    %v932 = vunpack.c.l.b16 %v104
    %v933 = vunpack.c.h.b16 %v104
    %v934 = vunpack.c.l.b16 %v105
    %v935 = vunpack.c.h.b16 %v105
    %v936 = vunpack.c.l.b16 %v106
    %v937 = vunpack.c.h.b16 %v106
    %v938 = vunpack.c.l.b16 %v107
    %v939 = vunpack.c.h.b16 %v107
    %v940 = vunpack.c.l.b16 %v108
    %v941 = vunpack.c.h.b16 %v108
    %v942 = vunpack.c.l.b16 %v109
    %v943 = vunpack.c.h.b16 %v109
    %v944 = vunpack.c.l.b16 %v110
    %v945 = vunpack.c.h.b16 %v110
    %v946 = vunpack.c.l.b16 %v111
    %v947 = vunpack.c.h.b16 %v111
    %v948 = vunpack.c.l.b16 %v112
    %v949 = vunpack.c.h.b16 %v112
    %v950 = vunpack.c.l.b16 %v113
    %v951 = vunpack.c.h.b16 %v113
    %v952 = vunpack.c.l.b16 %v114
    %v953 = vunpack.c.h.b16 %v114
    %v954 = vunpack.c.l.b16 %v115
    %v955 = vunpack.c.h.b16 %v115
    %v956 = vunpack.c.l.b16 %v116
    %v957 = vunpack.c.h.b16 %v116
    %v958 = vunpack.c.l.b16 %v117
    %v959 = vunpack.c.h.b16 %v117
    %v960 = vunpack.c.l.b16 %v118
    %v961 = vunpack.c.h.b16 %v118
    %v962 = vunpack.c.l.b16 %v119
    %v963 = vunpack.c.h.b16 %v119
    %v964 = vunpack.c.l.b16 %v120
    %v965 = vunpack.c.h.b16 %v120
    %v966 = vunpack.c.l.b16 %v121
    %v967 = vunpack.c.h.b16 %v121
    %v968 = vunpack.c.l.b16 %v122
    %v969 = vunpack.c.h.b16 %v122
    %v970 = vunpack.c.l.b16 %v123
    %v971 = vunpack.c.h.b16 %v123
    %v972 = vunpack.c.l.b16 %v124
    %v973 = vunpack.c.h.b16 %v124
    %v974 = vunpack.c.l.b16 %v125
    %v975 = vunpack.c.h.b16 %v125
    %v976 = vunpack.c.l.b16 %v126
    %v977 = vunpack.c.h.b16 %v126
    %v978 = vunpack.c.l.b16 %v127
    %v979 = vunpack.c.h.b16 %v127
    %v980 = vunpack.c.l.b16 %v128
    %v981 = vunpack.c.h.b16 %v128
    %v982 = vunpack.c.l.b16 %v129
    %v983 = vunpack.c.h.b16 %v129
    %v984 = vunpack.c.l.b16 %v130
    %v985 = vunpack.c.h.b16 %v130
    %v986 = vunpack.c.l.b16 %v131
    %v987 = vunpack.c.h.b16 %v131
    %v988 = vunpack.c.l.b16 %v132
    %v989 = vunpack.c.h.b16 %v132
    %v990 = vunpack.c.l.b16 %v133
    %v991 = vunpack.c.h.b16 %v133
    %v992 = vunpack.c.l.b16 %v134
    %v993 = vunpack.c.h.b16 %v134
    %v994 = vunpack.c.l.b16 %v135
    %v995 = vunpack.c.h.b16 %v135
    %v996 = vunpack.c.l.b16 %v136
    %v997 = vunpack.c.h.b16 %v136
    %v998 = vunpack.c.l.b16 %v137
    %v999 = vunpack.c.h.b16 %v137
    %v1000 = vunpack.c.l.b16 %v138
    %v1001 = vunpack.c.h.b16 %v138
    %v1002 = vunpack.c.l.b16 %v139
    %v1003 = vunpack.c.h.b16 %v139
    %v1004 = vunpack.c.l.b16 %v140
    %v1005 = vunpack.c.h.b16 %v140
    %v1006 = vunpack.c.l.b16 %v141
    %v1007 = vunpack.c.h.b16 %v141
    %v1008 = vunpack.c.l.b16 %v142
    %v1009 = vunpack.c.h.b16 %v142
    %v1010 = vunpack.c.l.b16 %v143
    %v1011 = vunpack.c.h.b16 %v143
    %v1012 = vunpack.c.l.b16 %v144
    %v1013 = vunpack.c.h.b16 %v144
    %v1014 = vunpack.c.l.b16 %v145
    %v1015 = vunpack.c.h.b16 %v145
    %v1016 = vunpack.c.l.b16 %v146
    %v1017 = vunpack.c.h.b16 %v146
    %v1018 = vunpack.c.l.b16 %v147
    %v1019 = vunpack.c.h.b16 %v147
    %v1020 = vunpack.c.l.b16 %v148
    %v1021 = vunpack.c.h.b16 %v148
    %v1022 = vunpack.c.l.b16 %v149
    %v1023 = vunpack.c.h.b16 %v149
    %v1024 = vunpack.c.l.b16 %v150
    %v1025 = vunpack.c.h.b16 %v150
    %v1026 = vunpack.c.l.b16 %v151
    %v1027 = vunpack.c.h.b16 %v151
    %v1028 = vunpack.c.l.b16 %v152
    %v1029 = vunpack.c.h.b16 %v152
    %v1030 = vunpack.c.l.b16 %v153
    %v1031 = vunpack.c.h.b16 %v153
    %v1032 = vunpack.c.l.b16 %v154
    %v1033 = vunpack.c.h.b16 %v154
    %v1034 = vunpack.c.l.b16 %v155
    %v1035 = vunpack.c.h.b16 %v155
    %v1036 = vunpack.c.l.b16 %v156
    %v1037 = vunpack.c.h.b16 %v156
    %v1038 = vunpack.c.l.b16 %v157
    %v1039 = vunpack.c.h.b16 %v157
    %v1040 = vunpack.c.l.b16 %v158
    %v1041 = vunpack.c.h.b16 %v158
    %v1042 = vunpack.c.l.b16 %v159
    %v1043 = vunpack.c.h.b16 %v159
    %v1044 = vunpack.c.l.b16 %v160
    %v1045 = vunpack.c.h.b16 %v160
    %v1046 = vunpack.c.l.b16 %v161
    %v1047 = vunpack.c.h.b16 %v161
    %v1048 = vunpack.c.l.b16 %v162
    %v1049 = vunpack.c.h.b16 %v162
    %v1050 = vunpack.c.l.b16 %v163
    %v1051 = vunpack.c.h.b16 %v163
    %v1052 = vunpack.c.l.b16 %v164
    %v1053 = vunpack.c.h.b16 %v164
    %v1054 = vunpack.c.l.b16 %v165
    %v1055 = vunpack.c.h.b16 %v165
    %v1056 = vunpack.c.l.b16 %v166
    %v1057 = vunpack.c.h.b16 %v166
    %v1058 = vunpack.c.l.b16 %v167
    %v1059 = vunpack.c.h.b16 %v167
    %v1060 = vunpack.c.l.b16 %v168
    %v1061 = vunpack.c.h.b16 %v168
    %v1062 = vunpack.c.l.b16 %v169
    %v1063 = vunpack.c.h.b16 %v169
    %v1064 = vunpack.c.l.b16 %v170
    %v1065 = vunpack.c.h.b16 %v170
    %v1066 = vunpack.c.l.b16 %v171
    %v1067 = vunpack.c.h.b16 %v171
    %v1068 = vunpack.c.l.b16 %v172
    %v1069 = vunpack.c.h.b16 %v172
    %v1070 = vunpack.c.l.b16 %v173
    %v1071 = vunpack.c.h.b16 %v173
    %v1072 = vunpack.c.l.b16 %v174
    %v1073 = vunpack.c.h.b16 %v174
    %v1074 = vunpack.c.l.b16 %v175
    %v1075 = vunpack.c.h.b16 %v175
    %v1076 = vunpack.c.l.b16 %v176
    %v1077 = vunpack.c.h.b16 %v176
    %v1078 = vunpack.c.l.b16 %v177
    %v1079 = vunpack.c.h.b16 %v177
    %v1080 = vunpack.c.l.b16 %v178
    %v1081 = vunpack.c.h.b16 %v178
    %v1082 = vunpack.c.l.b16 %v179
    %v1083 = vunpack.c.h.b16 %v179
    %v1084 = vunpack.c.l.b16 %v180
    %v1085 = vunpack.c.h.b16 %v180
    %v1086 = vunpack.c.l.b16 %v181
    %v1087 = vunpack.c.h.b16 %v181
    %v1088 = vunpack.c.l.b16 %v182
    %v1089 = vunpack.c.h.b16 %v182
    %v1090 = vunpack.c.l.b16 %v183
    %v1091 = vunpack.c.h.b16 %v183
    %v1092 = vunpack.c.l.b16 %v184
    %v1093 = vunpack.c.h.b16 %v184
    %v1094 = vunpack.c.l.b16 %v185
    %v1095 = vunpack.c.h.b16 %v185
    %v1096 = vunpack.c.l.b16 %v186
    %v1097 = vunpack.c.h.b16 %v186
    %v1098 = vunpack.c.l.b16 %v187
    %v1099 = vunpack.c.h.b16 %v187
    %v1100 = vunpack.c.l.b16 %v188
    %v1101 = vunpack.c.h.b16 %v188
    %v1102 = vunpack.c.l.b16 %v189
    %v1103 = vunpack.c.h.b16 %v189
    %v1104 = vunpack.c.l.b16 %v190
    %v1105 = vunpack.c.h.b16 %v190
    %v1106 = vunpack.c.l.b16 %v191
    %v1107 = vunpack.c.h.b16 %v191
    %v1108 = vunpack.c.l.b16 %v192
    %v1109 = vunpack.c.h.b16 %v192
    %v1110 = vunpack.c.l.b16 %v193
    %v1111 = vunpack.c.h.b16 %v193
    %v1112 = vunpack.c.l.b16 %v194
    %v1113 = vunpack.c.h.b16 %v194
    %v1114 = vunpack.c.l.b16 %v195
    %v1115 = vunpack.c.h.b16 %v195
    %v1116 = vunpack.c.l.b16 %v196
    %v1117 = vunpack.c.h.b16 %v196
    %v1118 = vunpack.c.l.b16 %v197
    %v1119 = vunpack.c.h.b16 %v197
    %v1120 = vunpack.c.l.b16 %v198
    %v1121 = vunpack.c.h.b16 %v198
    %v1122 = vunpack.c.l.b16 %v199
    %v1123 = vunpack.c.h.b16 %v199
    %v1124 = vunpack.c.l.b16 %v200
    %v1125 = vunpack.c.h.b16 %v200
    %v1126 = vunpack.c.l.b16 %v201
    %v1127 = vunpack.c.h.b16 %v201
    %v1128 = vunpack.c.l.b16 %v202
    %v1129 = vunpack.c.h.b16 %v202
    %v1130 = vunpack.c.l.b16 %v203
    %v1131 = vunpack.c.h.b16 %v203
    %v1132 = vunpack.c.l.b16 %v204
    %v1133 = vunpack.c.h.b16 %v204
    %v1134 = vunpack.c.l.b16 %v205
    %v1135 = vunpack.c.h.b16 %v205
    %v1136 = vunpack.c.l.b16 %v206
    %v1137 = vunpack.c.h.b16 %v206
    %v1138 = vunpack.c.l.b16 %v207
    %v1139 = vunpack.c.h.b16 %v207
    %v1140 = vunpack.c.l.b16 %v208
    %v1141 = vunpack.c.h.b16 %v208
    %v1142 = vunpack.c.l.b16 %v209
    %v1143 = vunpack.c.h.b16 %v209
    %v1144 = vunpack.c.l.b16 %v210
    %v1145 = vunpack.c.h.b16 %v210
    %v1146 = vunpack.c.l.b16 %v211
    %v1147 = vunpack.c.h.b16 %v211
    %v1148 = vunpack.c.l.b16 %v212
    %v1149 = vunpack.c.h.b16 %v212
    %v1150 = vunpack.c.l.b16 %v213
    %v1151 = vunpack.c.h.b16 %v213
    %v1152 = vunpack.c.l.b16 %v214
    %v1153 = vunpack.c.h.b16 %v214
    %v1154 = vunpack.c.l.b16 %v215
    %v1155 = vunpack.c.h.b16 %v215
    %v1156 = vunpack.c.l.b16 %v216
    %v1157 = vunpack.c.h.b16 %v216
    %v1158 = vunpack.c.l.b16 %v217
    %v1159 = vunpack.c.h.b16 %v217
    %v1160 = vunpack.c.l.b16 %v218
    %v1161 = vunpack.c.h.b16 %v218
    %v1162 = vunpack.c.l.b16 %v219
    %v1163 = vunpack.c.h.b16 %v219
    %v1164 = vunpack.c.l.b16 %v220
    %v1165 = vunpack.c.h.b16 %v220
    %v1166 = vunpack.c.l.b16 %v221
    %v1167 = vunpack.c.h.b16 %v221
    %v1168 = vunpack.c.l.b16 %v222
    %v1169 = vunpack.c.h.b16 %v222
    %v1170 = vunpack.c.l.b16 %v223
    %v1171 = vunpack.c.h.b16 %v223
    %v1172 = vunpack.c.l.b16 %v224
    %v1173 = vunpack.c.h.b16 %v224
    %v1174 = vunpack.c.l.b16 %v225
    %v1175 = vunpack.c.h.b16 %v225
    %v1176 = vunpack.c.l.b16 %v226
    %v1177 = vunpack.c.h.b16 %v226
    %v1178 = vunpack.c.l.b16 %v227
    %v1179 = vunpack.c.h.b16 %v227
    %v1180 = vunpack.c.l.b16 %v228
    %v1181 = vunpack.c.h.b16 %v228
    %v1182 = vunpack.c.l.b16 %v229
    %v1183 = vunpack.c.h.b16 %v229
    %v1184 = vunpack.c.l.b16 %v230
    %v1185 = vunpack.c.h.b16 %v230
    %v1186 = vunpack.c.l.b16 %v231
    %v1187 = vunpack.c.h.b16 %v231
    %v1188 = vunpack.c.l.b16 %v232
    %v1189 = vunpack.c.h.b16 %v232
    %v1190 = vunpack.c.l.b16 %v233
    %v1191 = vunpack.c.h.b16 %v233
    %v1192 = vunpack.c.l.b16 %v234
    %v1193 = vunpack.c.h.b16 %v234
    %v1194 = vunpack.c.l.b16 %v235
    %v1195 = vunpack.c.h.b16 %v235
    %v1196 = vunpack.c.l.b16 %v236
    %v1197 = vunpack.c.h.b16 %v236
    %v1198 = vunpack.c.l.b16 %v237
    %v1199 = vunpack.c.h.b16 %v237
    %v1200 = vunpack.c.l.b16 %v238
    %v1201 = vunpack.c.h.b16 %v238
    %v1202 = vunpack.c.l.b16 %v239
    %v1203 = vunpack.c.h.b16 %v239
    %v1204 = vunpack.c.l.b16 %v240
    %v1205 = vunpack.c.h.b16 %v240
    %v1206 = vunpack.c.l.b16 %v241
    %v1207 = vunpack.c.h.b16 %v241
    %v1208 = vunpack.c.l.b16 %v242
    %v1209 = vunpack.c.h.b16 %v242
    %v1210 = vunpack.c.l.b16 %v243
    %v1211 = vunpack.c.h.b16 %v243
    %v1212 = vunpack.c.l.b16 %v244
    %v1213 = vunpack.c.h.b16 %v244
    %v1214 = vunpack.c.l.b16 %v245
    %v1215 = vunpack.c.h.b16 %v245
    %v1216 = vunpack.c.l.b16 %v246
    %v1217 = vunpack.c.h.b16 %v246
    %v1218 = vunpack.c.l.b16 %v247
    %v1219 = vunpack.c.h.b16 %v247
    %v1220 = vunpack.c.l.b16 %v248
    %v1221 = vunpack.c.h.b16 %v248
    %v1222 = vunpack.c.l.b16 %v249
    %v1223 = vunpack.c.h.b16 %v249
    %v1224 = vunpack.c.l.b16 %v250
    %v1225 = vunpack.c.h.b16 %v250
    %v1226 = vunpack.c.l.b16 %v251
    %v1227 = vunpack.c.h.b16 %v251
    %v1228 = vunpack.c.l.b16 %v252
    %v1229 = vunpack.c.h.b16 %v252
    %v1230 = vunpack.c.l.b16 %v253
    %v1231 = vunpack.c.h.b16 %v253
    %v1232 = vunpack.c.l.b16 %v254
    %v1233 = vunpack.c.h.b16 %v254
    %v1234 = vunpack.c.l.b16 %v255
    %v1235 = vunpack.c.h.b16 %v255
    %v1236 = vunpack.c.l.b16 %v256
    %v1237 = vunpack.c.h.b16 %v256
    %v1238 = vunpack.c.l.b16 %v257
    %v1239 = vunpack.c.h.b16 %v257
    %v1240 = vunpack.c.l.b16 %v258
    %v1241 = vunpack.c.h.b16 %v258
    %v1242 = vunpack.c.l.b16 %v259
    %v1243 = vunpack.c.h.b16 %v259
    %v1244 = vunpack.c.l.b16 %v260
    %v1245 = vunpack.c.h.b16 %v260
    %v1246 = vunpack.c.l.b16 %v261
    %v1247 = vunpack.c.h.b16 %v261
    %v1248 = vunpack.c.l.b16 %v262
    %v1249 = vunpack.c.h.b16 %v262
    %v1250 = vunpack.c.l.b16 %v263
    %v1251 = vunpack.c.h.b16 %v263
    %v1252 = vunpack.c.l.b16 %v264
    %v1253 = vunpack.c.h.b16 %v264
    %v1254 = vunpack.c.l.b16 %v265
    %v1255 = vunpack.c.h.b16 %v265
    %v1256 = vunpack.c.l.b16 %v266
    %v1257 = vunpack.c.h.b16 %v266
    %v1258 = vunpack.c.l.b16 %v267
    %v1259 = vunpack.c.h.b16 %v267
    %v1260 = vunpack.c.l.b16 %v268
    %v1261 = vunpack.c.h.b16 %v268
    %v1262 = vunpack.c.l.b16 %v269
    %v1263 = vunpack.c.h.b16 %v269
    %v1264 = vunpack.c.l.b16 %v270
    %v1265 = vunpack.c.h.b16 %v270
    %v1266 = vunpack.c.l.b16 %v271
    %v1267 = vunpack.c.h.b16 %v271
    %v1268 = vunpack.c.l.b16 %v272
    %v1269 = vunpack.c.h.b16 %v272
    %v1270 = vunpack.c.l.b16 %v273
    %v1271 = vunpack.c.h.b16 %v273
    %v1272 = vunpack.c.l.b16 %v274
    %v1273 = vunpack.c.h.b16 %v274
    %v1274 = vunpack.c.l.b16 %v275
    %v1275 = vunpack.c.h.b16 %v275
    %v1276 = vunpack.c.l.b16 %v276
    %v1277 = vunpack.c.h.b16 %v276
    %v1278 = vunpack.c.l.b16 %v277
    %v1279 = vunpack.c.h.b16 %v277
    %v1280 = vunpack.c.l.b16 %v278
    %v1281 = vunpack.c.h.b16 %v278
    %v1282 = vunpack.c.l.b16 %v279
    %v1283 = vunpack.c.h.b16 %v279
    %v1284 = vunpack.c.l.b16 %v280
    %v1285 = vunpack.c.h.b16 %v280
    %v1286 = vunpack.c.l.b16 %v281
    %v1287 = vunpack.c.h.b16 %v281
    %v1288 = vunpack.c.l.b16 %v282
    %v1289 = vunpack.c.h.b16 %v282
    %v1290 = vunpack.c.l.b16 %v283
    %v1291 = vunpack.c.h.b16 %v283
    %v1292 = vunpack.c.l.b16 %v284
    %v1293 = vunpack.c.h.b16 %v284
    %v1294 = vunpack.c.l.b16 %v285
    %v1295 = vunpack.c.h.b16 %v285
    %v1296 = vunpack.c.l.b16 %v286
    %v1297 = vunpack.c.h.b16 %v286
    %v1298 = vunpack.c.l.b16 %v287
    %v1299 = vunpack.c.h.b16 %v287
    %v1300 = vunpack.c.l.b16 %v288
    %v1301 = vunpack.c.h.b16 %v288
    %v1302 = vunpack.c.l.b16 %v289
    %v1303 = vunpack.c.h.b16 %v289
    %v1304 = vunpack.c.l.b16 %v290
    %v1305 = vunpack.c.h.b16 %v290
    %v1306 = vunpack.c.l.b16 %v291
    %v1307 = vunpack.c.h.b16 %v291
    %v1308 = vunpack.c.l.b16 %v292
    %v1309 = vunpack.c.h.b16 %v292
    %v1310 = vunpack.c.l.b16 %v293
    %v1311 = vunpack.c.h.b16 %v293
    %v1312 = vunpack.c.l.b16 %v294
    %v1313 = vunpack.c.h.b16 %v294
    %v1314 = vunpack.c.l.b16 %v295
    %v1315 = vunpack.c.h.b16 %v295
    %v1316 = vunpack.c.l.b16 %v296
    %v1317 = vunpack.c.h.b16 %v296
    %v1318 = vunpack.c.l.b16 %v297
    %v1319 = vunpack.c.h.b16 %v297
    %v1320 = vunpack.c.l.b16 %v298
    %v1321 = vunpack.c.h.b16 %v298
    %v1322 = vunpack.c.l.b16 %v299
    %v1323 = vunpack.c.h.b16 %v299
    %v1324 = vunpack.c.l.b16 %v300
    %v1325 = vunpack.c.h.b16 %v300
    %v1326 = vunpack.c.l.b16 %v301
    %v1327 = vunpack.c.h.b16 %v301
    %v1328 = vunpack.c.l.b16 %v302
    %v1329 = vunpack.c.h.b16 %v302
    %v1330 = vunpack.c.l.b16 %v303
    %v1331 = vunpack.c.h.b16 %v303
    %v1332 = vunpack.c.l.b16 %v304
    %v1333 = vunpack.c.h.b16 %v304
    %v1334 = vunpack.c.l.b16 %v305
    %v1335 = vunpack.c.h.b16 %v305
    %v1336 = vunpack.c.l.b16 %v306
    %v1337 = vunpack.c.h.b16 %v306
    %v1338 = vunpack.c.l.b16 %v307
    %v1339 = vunpack.c.h.b16 %v307
    %v1340 = vunpack.c.l.b16 %v308
    %v1341 = vunpack.c.h.b16 %v308
    %v1342 = vunpack.c.l.b16 %v309
    %v1343 = vunpack.c.h.b16 %v309
    %v1344 = vunpack.c.l.b16 %v310
    %v1345 = vunpack.c.h.b16 %v310
    %v1346 = vunpack.c.l.b16 %v311
    %v1347 = vunpack.c.h.b16 %v311
    %v1348 = vunpack.c.l.b16 %v312
    %v1349 = vunpack.c.h.b16 %v312
    %v1350 = vunpack.c.l.b16 %v313
    %v1351 = vunpack.c.h.b16 %v313
    %v1352 = vunpack.c.l.b16 %v314
    %v1353 = vunpack.c.h.b16 %v314
    %v1354 = vunpack.c.l.b16 %v315
    %v1355 = vunpack.c.h.b16 %v315
    %v1356 = vunpack.c.l.b16 %v316
    %v1357 = vunpack.c.h.b16 %v316
    %v1358 = vunpack.c.l.b16 %v317
    %v1359 = vunpack.c.h.b16 %v317
    %v1360 = vunpack.c.l.b16 %v318
    %v1361 = vunpack.c.h.b16 %v318
    %v1362 = vunpack.c.l.b16 %v319
    %v1363 = vunpack.c.h.b16 %v319
    %v1364 = vunpack.c.l.b16 %v320
    %v1365 = vunpack.c.h.b16 %v320
    %v1366 = vunpack.c.l.b16 %v321
    %v1367 = vunpack.c.h.b16 %v321
    %v1368 = vunpack.c.l.b16 %v322
    %v1369 = vunpack.c.h.b16 %v322
    %v1370 = vunpack.c.l.b16 %v323
    %v1371 = vunpack.c.h.b16 %v323
    %v1372 = vunpack.c.l.b16 %v324
    %v1373 = vunpack.c.h.b16 %v324
    %v1374 = vunpack.c.l.b16 %v325
    %v1375 = vunpack.c.h.b16 %v325
    %v1376 = vunpack.c.l.b16 %v326
    %v1377 = vunpack.c.h.b16 %v326
    %v1378 = vunpack.c.l.b16 %v327
    %v1379 = vunpack.c.h.b16 %v327
    %v1380 = vunpack.c.l.b16 %v328
    %v1381 = vunpack.c.h.b16 %v328
    %v1382 = vunpack.c.l.b16 %v329
    %v1383 = vunpack.c.h.b16 %v329
    %v1384 = vunpack.c.l.b16 %v330
    %v1385 = vunpack.c.h.b16 %v330
    %v1386 = vunpack.c.l.b16 %v331
    %v1387 = vunpack.c.h.b16 %v331
    %v1388 = vunpack.c.l.b16 %v332
    %v1389 = vunpack.c.h.b16 %v332
    %v1390 = vunpack.c.l.b16 %v333
    %v1391 = vunpack.c.h.b16 %v333
    %v1392 = vunpack.c.l.b16 %v334
    %v1393 = vunpack.c.h.b16 %v334
    %v1394 = vunpack.c.l.b16 %v335
    %v1395 = vunpack.c.h.b16 %v335
    %v1396 = vunpack.c.l.b16 %v336
    %v1397 = vunpack.c.h.b16 %v336
    %v1398 = vunpack.c.l.b16 %v337
    %v1399 = vunpack.c.h.b16 %v337
    %v1400 = vunpack.c.l.b16 %v338
    %v1401 = vunpack.c.h.b16 %v338
    %v1402 = vunpack.c.l.b16 %v339
    %v1403 = vunpack.c.h.b16 %v339
    %v1404 = vunpack.c.l.b16 %v340
    %v1405 = vunpack.c.h.b16 %v340
    %v1406 = vunpack.c.l.b16 %v341
    %v1407 = vunpack.c.h.b16 %v341
    %v1408 = vunpack.c.l.b16 %v342
    %v1409 = vunpack.c.h.b16 %v342
    %v1410 = vunpack.c.l.b16 %v343
    %v1411 = vunpack.c.h.b16 %v343
    %v1412 = vunpack.c.l.b16 %v344
    %v1413 = vunpack.c.h.b16 %v344
    %v1414 = vunpack.c.l.b16 %v345
    %v1415 = vunpack.c.h.b16 %v345
    %v1416 = vunpack.c.l.b16 %v346
    %v1417 = vunpack.c.h.b16 %v346
    %v1418 = vunpack.c.l.b16 %v347
    %v1419 = vunpack.c.h.b16 %v347
    %v1420 = vunpack.c.l.b16 %v348
    %v1421 = vunpack.c.h.b16 %v348
    %v1422 = vunpack.c.l.b16 %v349
    %v1423 = vunpack.c.h.b16 %v349
    %v1424 = vunpack.c.l.b16 %v350
    %v1425 = vunpack.c.h.b16 %v350
    %v1426 = vunpack.c.l.b16 %v351
    %v1427 = vunpack.c.h.b16 %v351
    %v1428 = vunpack.c.l.b16 %v352
    %v1429 = vunpack.c.h.b16 %v352
    %v1430 = vunpack.c.l.b16 %v353
    %v1431 = vunpack.c.h.b16 %v353
    %v1432 = vunpack.c.l.b16 %v354
    %v1433 = vunpack.c.h.b16 %v354
    %v1434 = vunpack.c.l.b16 %v355
    %v1435 = vunpack.c.h.b16 %v355
    %v1436 = vunpack.c.l.b16 %v356
    %v1437 = vunpack.c.h.b16 %v356
    %v1438 = vunpack.c.l.b16 %v357
    %v1439 = vunpack.c.h.b16 %v357
    %v1440 = vunpack.c.l.b16 %v358
    %v1441 = vunpack.c.h.b16 %v358
    %v1442 = vunpack.c.l.b16 %v359
    %v1443 = vunpack.c.h.b16 %v359
    %v1444 = vunpack.c.l.b16 %v360
    %v1445 = vunpack.c.h.b16 %v360
    %v1446 = vunpack.c.l.b16 %v361
    %v1447 = vunpack.c.h.b16 %v361
    %v1448 = vunpack.c.l.b16 %v362
    %v1449 = vunpack.c.h.b16 %v362
    %v1450 = vunpack.c.l.b16 %v363
    %v1451 = vunpack.c.h.b16 %v363
    %v1452 = vunpack.c.l.b16 %v364
    %v1453 = vunpack.c.h.b16 %v364
    %v1454 = vunpack.c.l.b16 %v365
    %v1455 = vunpack.c.h.b16 %v365
    %v1456 = vunpack.c.l.b16 %v366
    %v1457 = vunpack.c.h.b16 %v366
    %v1458 = vunpack.c.l.b16 %v367
    %v1459 = vunpack.c.h.b16 %v367
    %v1460 = vunpack.c.l.b16 %v368
    %v1461 = vunpack.c.h.b16 %v368
    %v1462 = vunpack.c.l.b16 %v369
    %v1463 = vunpack.c.h.b16 %v369
    %v1464 = vunpack.c.l.b16 %v370
    %v1465 = vunpack.c.h.b16 %v370
    %v1466 = vunpack.c.l.b16 %v371
    %v1467 = vunpack.c.h.b16 %v371
    %v1468 = vunpack.c.l.b16 %v372
    %v1469 = vunpack.c.h.b16 %v372
    %v1470 = vunpack.c.l.b16 %v373
    %v1471 = vunpack.c.h.b16 %v373
    %v1472 = vunpack.c.l.b16 %v374
    %v1473 = vunpack.c.h.b16 %v374
    %v1474 = vunpack.c.l.b16 %v375
    %v1475 = vunpack.c.h.b16 %v375
    %v1476 = vunpack.c.l.b16 %v376
    %v1477 = vunpack.c.h.b16 %v376
    %v1478 = vunpack.c.l.b16 %v377
    %v1479 = vunpack.c.h.b16 %v377
    %v1480 = vunpack.c.l.b16 %v378
    %v1481 = vunpack.c.h.b16 %v378
    %v1482 = vunpack.c.l.b16 %v379
    %v1483 = vunpack.c.h.b16 %v379
    %v1484 = vunpack.c.l.b16 %v380
    %v1485 = vunpack.c.h.b16 %v380
    %v1486 = vunpack.c.l.b16 %v381
    %v1487 = vunpack.c.h.b16 %v381
    %v1488 = vunpack.c.l.b16 %v382
    %v1489 = vunpack.c.h.b16 %v382
    %v1490 = vunpack.c.l.b16 %v383
    %v1491 = vunpack.c.h.b16 %v383
    %v1492 = vunpack.c.l.b16 %v384
    %v1493 = vunpack.c.h.b16 %v384
    %v1494 = vunpack.c.l.b16 %v385
    %v1495 = vunpack.c.h.b16 %v385
    %v1496 = vunpack.c.l.b16 %v386
    %v1497 = vunpack.c.h.b16 %v386
    %v1498 = vunpack.c.l.b16 %v387
    %v1499 = vunpack.c.h.b16 %v387
    %v1500 = vunpack.c.l.b16 %v388
    %v1501 = vunpack.c.h.b16 %v388
    %v1502 = vunpack.c.l.b16 %v389
    %v1503 = vunpack.c.h.b16 %v389
    %v1504 = vunpack.c.l.b16 %v390
    %v1505 = vunpack.c.h.b16 %v390
    %v1506 = vunpack.c.l.b16 %v391
    %v1507 = vunpack.c.h.b16 %v391
    %v1508 = vunpack.c.l.b16 %v392
    %v1509 = vunpack.c.h.b16 %v392
    %v1510 = vunpack.c.l.b16 %v393
    %v1511 = vunpack.c.h.b16 %v393
    %v1512 = vunpack.c.l.b16 %v394
    %v1513 = vunpack.c.h.b16 %v394
    %v1514 = vunpack.c.l.b16 %v395
    %v1515 = vunpack.c.h.b16 %v395
    %v1516 = vunpack.c.l.b16 %v396
    %v1517 = vunpack.c.h.b16 %v396
    %v1518 = vunpack.c.l.b16 %v397
    %v1519 = vunpack.c.h.b16 %v397
    %v1520 = vunpack.c.l.b16 %v398
    %v1521 = vunpack.c.h.b16 %v398
    %v1522 = vunpack.c.l.b16 %v399
    %v1523 = vunpack.c.h.b16 %v399
    %v1524 = vunpack.c.l.b16 %v400
    %v1525 = vunpack.c.h.b16 %v400
    %v1526 = vunpack.c.l.b16 %v401
    %v1527 = vunpack.c.h.b16 %v401
    %v1528 = vunpack.c.l.b16 %v402
    %v1529 = vunpack.c.h.b16 %v402
    %v1530 = vunpack.c.l.b16 %v403
    %v1531 = vunpack.c.h.b16 %v403
    %v1532 = vunpack.c.l.b16 %v404
    %v1533 = vunpack.c.h.b16 %v404
    %v1534 = vunpack.c.l.b16 %v405
    %v1535 = vunpack.c.h.b16 %v405
    %v1536 = vunpack.c.l.b16 %v406
    %v1537 = vunpack.c.h.b16 %v406
    %v1538 = vunpack.c.l.b16 %v407
    %v1539 = vunpack.c.h.b16 %v407
    %v1540 = vunpack.c.l.b16 %v408
    %v1541 = vunpack.c.h.b16 %v408
    %v1542 = vunpack.c.l.b16 %v409
    %v1543 = vunpack.c.h.b16 %v409
    %v1544 = vunpack.c.l.b16 %v410
    %v1545 = vunpack.c.h.b16 %v410
    %v1546 = vunpack.c.l.b16 %v411
    %v1547 = vunpack.c.h.b16 %v411
    %v1548 = vunpack.c.l.b16 %v412
    %v1549 = vunpack.c.h.b16 %v412
    %v1550 = vunpack.c.l.b16 %v413
    %v1551 = vunpack.c.h.b16 %v413
    %v1552 = vunpack.c.l.b16 %v414
    %v1553 = vunpack.c.h.b16 %v414
    %v1554 = vunpack.c.l.b16 %v415
    %v1555 = vunpack.c.h.b16 %v415
    %v1556 = vunpack.c.l.b16 %v416
    %v1557 = vunpack.c.h.b16 %v416
    %v1558 = vunpack.c.l.b16 %v417
    %v1559 = vunpack.c.h.b16 %v417
    %v1560 = vunpack.c.l.b16 %v418
    %v1561 = vunpack.c.h.b16 %v418
    %v1562 = vunpack.c.l.b16 %v419
    %v1563 = vunpack.c.h.b16 %v419
    %v1564 = vunpack.c.l.b16 %v420
    %v1565 = vunpack.c.h.b16 %v420
    %v1566 = vunpack.c.l.b16 %v421
    %v1567 = vunpack.c.h.b16 %v421
    %v1568 = vunpack.c.l.b16 %v422
    %v1569 = vunpack.c.h.b16 %v422
    %v1570 = vunpack.c.l.b16 %v423
    %v1571 = vunpack.c.h.b16 %v423
    %v1572 = vunpack.c.l.b16 %v424
    %v1573 = vunpack.c.h.b16 %v424
    %v1574 = vunpack.c.l.b16 %v425
    %v1575 = vunpack.c.h.b16 %v425
    %v1576 = vunpack.c.l.b16 %v426
    %v1577 = vunpack.c.h.b16 %v426
    %v1578 = vunpack.c.l.b16 %v427
    %v1579 = vunpack.c.h.b16 %v427
    %v1580 = vunpack.c.l.b16 %v428
    %v1581 = vunpack.c.h.b16 %v428
    %v1582 = vunpack.c.l.b16 %v429
    %v1583 = vunpack.c.h.b16 %v429
    %v1584 = vunpack.c.l.b16 %v430
    %v1585 = vunpack.c.h.b16 %v430
    %v1586 = vunpack.c.l.b16 %v431
    %v1587 = vunpack.c.h.b16 %v431
    %v1588 = vunpack.c.l.b16 %v432
    %v1589 = vunpack.c.h.b16 %v432
    %v1590 = vunpack.c.l.b16 %v433
    %v1591 = vunpack.c.h.b16 %v433
    %v1592 = vunpack.c.l.b16 %v434
    %v1593 = vunpack.c.h.b16 %v434
    %v1594 = vunpack.c.l.b16 %v435
    %v1595 = vunpack.c.h.b16 %v435
    %v1596 = vunpack.c.l.b16 %v436
    %v1597 = vunpack.c.h.b16 %v436
    %v1598 = vunpack.c.l.b16 %v437
    %v1599 = vunpack.c.h.b16 %v437
    %v1600 = vunpack.c.l.b16 %v438
    %v1601 = vunpack.c.h.b16 %v438
    %v1602 = vunpack.c.l.b16 %v439
    %v1603 = vunpack.c.h.b16 %v439
    %v1604 = vunpack.c.l.b16 %v440
    %v1605 = vunpack.c.h.b16 %v440
    %v1606 = vunpack.c.l.b16 %v441
    %v1607 = vunpack.c.h.b16 %v441
    %v1608 = vunpack.c.l.b16 %v442
    %v1609 = vunpack.c.h.b16 %v442
    %v1610 = vpack.c.b16 %v850, %v842
    %v1611 = vpack.c.b16 %v851, %v843
    %v1612 = vpack.c.b16 %v852, %v844
    %v1613 = vpack.c.b16 %v853, %v845
    %v1614 = vpack.c.b16 %v854, %v846
    %v1615 = vpack.c.b16 %v855, %v847
    %v1616 = vpack.c.b16 %v856, %v848
    %v1617 = vpack.c.b16 %v857, %v849
    %v1618 = vpack.c.b16 %v866, %v858
    %v1619 = vpack.c.b16 %v867, %v859
    %v1620 = vpack.c.b16 %v868, %v860
    %v1621 = vpack.c.b16 %v869, %v861
    %v1622 = vpack.c.b16 %v870, %v862
    %v1623 = vpack.c.b16 %v871, %v863
    %v1624 = vpack.c.b16 %v872, %v864
    %v1625 = vpack.c.b16 %v873, %v865
    %v1626 = vpack.c.b16 %v882, %v874
    %v1627 = vpack.c.b16 %v883, %v875
    %v1628 = vpack.c.b16 %v884, %v876
    %v1629 = vpack.c.b16 %v885, %v877
    %v1630 = vpack.c.b16 %v886, %v878
    %v1631 = vpack.c.b16 %v887, %v879
    %v1632 = vpack.c.b16 %v888, %v880
    %v1633 = vpack.c.b16 %v889, %v881
    %v1634 = vpack.c.b16 %v898, %v890
    %v1635 = vpack.c.b16 %v899, %v891
    %v1636 = vpack.c.b16 %v900, %v892
    %v1637 = vpack.c.b16 %v901, %v893
    %v1638 = vpack.c.b16 %v902, %v894
    %v1639 = vpack.c.b16 %v903, %v895
    %v1640 = vpack.c.b16 %v904, %v896
    %v1641 = vpack.c.b16 %v905, %v897
    %v1642 = vpack.c.b16 %v914, %v906
    %v1643 = vpack.c.b16 %v915, %v907
    %v1644 = vpack.c.b16 %v916, %v908
    %v1645 = vpack.c.b16 %v917, %v909
    %v1646 = vpack.c.b16 %v918, %v910
    %v1647 = vpack.c.b16 %v919, %v911
    %v1648 = vpack.c.b16 %v920, %v912
    %v1649 = vpack.c.b16 %v921, %v913
    %v1650 = vpack.c.b16 %v930, %v922
    %v1651 = vpack.c.b16 %v931, %v923
    %v1652 = vpack.c.b16 %v932, %v924
    %v1653 = vpack.c.b16 %v933, %v925
    %v1654 = vpack.c.b16 %v934, %v926
    %v1655 = vpack.c.b16 %v935, %v927
    %v1656 = vpack.c.b16 %v936, %v928
    %v1657 = vpack.c.b16 %v937, %v929
    %v1658 = vpack.c.b16 %v946, %v938
    %v1659 = vpack.c.b16 %v947, %v939
    %v1660 = vpack.c.b16 %v948, %v940
    %v1661 = vpack.c.b16 %v949, %v941
    %v1662 = vpack.c.b16 %v950, %v942
    %v1663 = vpack.c.b16 %v951, %v943
    %v1664 = vpack.c.b16 %v952, %v944
    %v1665 = vpack.c.b16 %v953, %v945
    %v1666 = vpack.c.b16 %v962, %v954
    %v1667 = vpack.c.b16 %v963, %v955
    %v1668 = vpack.c.b16 %v964, %v956
    %v1669 = vpack.c.b16 %v965, %v957
    %v1670 = vpack.c.b16 %v966, %v958
    %v1671 = vpack.c.b16 %v967, %v959
    %v1672 = vpack.c.b16 %v968, %v960
    %v1673 = vpack.c.b16 %v969, %v961
    %v1674 = vpack.c.b16 %v978, %v970
    %v1675 = vpack.c.b16 %v979, %v971
    %v1676 = vpack.c.b16 %v980, %v972
    %v1677 = vpack.c.b16 %v981, %v973
    %v1678 = vpack.c.b16 %v982, %v974
    %v1679 = vpack.c.b16 %v983, %v975
    %v1680 = vpack.c.b16 %v984, %v976
    %v1681 = vpack.c.b16 %v985, %v977
    %v1682 = vpack.c.b16 %v994, %v986
    %v1683 = vpack.c.b16 %v995, %v987
    %v1684 = vpack.c.b16 %v996, %v988
    %v1685 = vpack.c.b16 %v997, %v989
    %v1686 = vpack.c.b16 %v998, %v990
    %v1687 = vpack.c.b16 %v999, %v991
    %v1688 = vpack.c.b16 %v1000, %v992
    %v1689 = vpack.c.b16 %v1001, %v993
    %v1690 = vpack.c.b16 %v1010, %v1002
    %v1691 = vpack.c.b16 %v1011, %v1003
    %v1692 = vpack.c.b16 %v1012, %v1004
    %v1693 = vpack.c.b16 %v1013, %v1005
    %v1694 = vpack.c.b16 %v1014, %v1006
    %v1695 = vpack.c.b16 %v1015, %v1007
    %v1696 = vpack.c.b16 %v1016, %v1008
    %v1697 = vpack.c.b16 %v1017, %v1009
    %v1698 = vpack.c.b16 %v1026, %v1018
    %v1699 = vpack.c.b16 %v1027, %v1019
    %v1700 = vpack.c.b16 %v1028, %v1020
    %v1701 = vpack.c.b16 %v1029, %v1021
    %v1702 = vpack.c.b16 %v1030, %v1022
    %v1703 = vpack.c.b16 %v1031, %v1023
    %v1704 = vpack.c.b16 %v1032, %v1024
    %v1705 = vpack.c.b16 %v1033, %v1025
    %v1706 = vpack.c.b16 %v1042, %v1034
    %v1707 = vpack.c.b16 %v1043, %v1035
    %v1708 = vpack.c.b16 %v1044, %v1036
    %v1709 = vpack.c.b16 %v1045, %v1037
    %v1710 = vpack.c.b16 %v1046, %v1038
    %v1711 = vpack.c.b16 %v1047, %v1039
    %v1712 = vpack.c.b16 %v1048, %v1040
    %v1713 = vpack.c.b16 %v1049, %v1041
    %v1714 = vpack.c.b16 %v1058, %v1050
    %v1715 = vpack.c.b16 %v1059, %v1051
    %v1716 = vpack.c.b16 %v1060, %v1052
    %v1717 = vpack.c.b16 %v1061, %v1053
    %v1718 = vpack.c.b16 %v1062, %v1054
    %v1719 = vpack.c.b16 %v1063, %v1055
    %v1720 = vpack.c.b16 %v1064, %v1056
    %v1721 = vpack.c.b16 %v1065, %v1057
    %v1722 = vpack.c.b16 %v1074, %v1066
    %v1723 = vpack.c.b16 %v1075, %v1067
    %v1724 = vpack.c.b16 %v1076, %v1068
    %v1725 = vpack.c.b16 %v1077, %v1069
    %v1726 = vpack.c.b16 %v1078, %v1070
    %v1727 = vpack.c.b16 %v1079, %v1071
    %v1728 = vpack.c.b16 %v1080, %v1072
    %v1729 = vpack.c.b16 %v1081, %v1073
    %v1730 = vpack.c.b16 %v1090, %v1082
    %v1731 = vpack.c.b16 %v1091, %v1083
    %v1732 = vpack.c.b16 %v1092, %v1084
    %v1733 = vpack.c.b16 %v1093, %v1085
    %v1734 = vpack.c.b16 %v1094, %v1086
    %v1735 = vpack.c.b16 %v1095, %v1087
    %v1736 = vpack.c.b16 %v1096, %v1088
    %v1737 = vpack.c.b16 %v1097, %v1089
    %v1738 = vpack.c.b16 %v1106, %v1098
    %v1739 = vpack.c.b16 %v1107, %v1099
    %v1740 = vpack.c.b16 %v1108, %v1100
    %v1741 = vpack.c.b16 %v1109, %v1101
    %v1742 = vpack.c.b16 %v1110, %v1102
    %v1743 = vpack.c.b16 %v1111, %v1103
    %v1744 = vpack.c.b16 %v1112, %v1104
    %v1745 = vpack.c.b16 %v1113, %v1105
    %v1746 = vpack.c.b16 %v1122, %v1114
    %v1747 = vpack.c.b16 %v1123, %v1115
    %v1748 = vpack.c.b16 %v1124, %v1116
    %v1749 = vpack.c.b16 %v1125, %v1117
    %v1750 = vpack.c.b16 %v1126, %v1118
    %v1751 = vpack.c.b16 %v1127, %v1119
    %v1752 = vpack.c.b16 %v1128, %v1120
    %v1753 = vpack.c.b16 %v1129, %v1121
    %v1754 = vpack.c.b16 %v1138, %v1130
    %v1755 = vpack.c.b16 %v1139, %v1131
    %v1756 = vpack.c.b16 %v1140, %v1132
    %v1757 = vpack.c.b16 %v1141, %v1133
    %v1758 = vpack.c.b16 %v1142, %v1134
    %v1759 = vpack.c.b16 %v1143, %v1135
    %v1760 = vpack.c.b16 %v1144, %v1136
    %v1761 = vpack.c.b16 %v1145, %v1137
    %v1762 = vpack.c.b16 %v1154, %v1146
    %v1763 = vpack.c.b16 %v1155, %v1147
    %v1764 = vpack.c.b16 %v1156, %v1148
    %v1765 = vpack.c.b16 %v1157, %v1149
    %v1766 = vpack.c.b16 %v1158, %v1150
    %v1767 = vpack.c.b16 %v1159, %v1151
    %v1768 = vpack.c.b16 %v1160, %v1152
    %v1769 = vpack.c.b16 %v1161, %v1153
    %v1770 = vpack.c.b16 %v1170, %v1162
    %v1771 = vpack.c.b16 %v1171, %v1163
    %v1772 = vpack.c.b16 %v1172, %v1164
    %v1773 = vpack.c.b16 %v1173, %v1165
    %v1774 = vpack.c.b16 %v1174, %v1166
    %v1775 = vpack.c.b16 %v1175, %v1167
    %v1776 = vpack.c.b16 %v1176, %v1168
    %v1777 = vpack.c.b16 %v1177, %v1169
    %v1778 = vpack.c.b16 %v1186, %v1178
    %v1779 = vpack.c.b16 %v1187, %v1179
    %v1780 = vpack.c.b16 %v1188, %v1180
    %v1781 = vpack.c.b16 %v1189, %v1181
    %v1782 = vpack.c.b16 %v1190, %v1182
    %v1783 = vpack.c.b16 %v1191, %v1183
    %v1784 = vpack.c.b16 %v1192, %v1184
    %v1785 = vpack.c.b16 %v1193, %v1185
    %v1786 = vpack.c.b16 %v1202, %v1194
    %v1787 = vpack.c.b16 %v1203, %v1195
    %v1788 = vpack.c.b16 %v1204, %v1196
    %v1789 = vpack.c.b16 %v1205, %v1197
    %v1790 = vpack.c.b16 %v1206, %v1198
    %v1791 = vpack.c.b16 %v1207, %v1199
    %v1792 = vpack.c.b16 %v1208, %v1200
    %v1793 = vpack.c.b16 %v1209, %v1201
    %v1794 = vpack.c.b16 %v1218, %v1210
    %v1795 = vpack.c.b16 %v1219, %v1211
    %v1796 = vpack.c.b16 %v1220, %v1212
    %v1797 = vpack.c.b16 %v1221, %v1213
    %v1798 = vpack.c.b16 %v1222, %v1214
    %v1799 = vpack.c.b16 %v1223, %v1215
    %v1800 = vpack.c.b16 %v1224, %v1216
    %v1801 = vpack.c.b16 %v1225, %v1217
    %v1802 = vpack.c.b16 %v1234, %v1226
    %v1803 = vpack.c.b16 %v1235, %v1227
    %v1804 = vpack.c.b16 %v1236, %v1228
    %v1805 = vpack.c.b16 %v1237, %v1229
    %v1806 = vpack.c.b16 %v1238, %v1230
    %v1807 = vpack.c.b16 %v1239, %v1231
    %v1808 = vpack.c.b16 %v1240, %v1232
    %v1809 = vpack.c.b16 %v1241, %v1233
    %v1810 = vpack.c.b16 %v1250, %v1242
    %v1811 = vpack.c.b16 %v1251, %v1243
    %v1812 = vpack.c.b16 %v1252, %v1244
    %v1813 = vpack.c.b16 %v1253, %v1245
    %v1814 = vpack.c.b16 %v1254, %v1246
    %v1815 = vpack.c.b16 %v1255, %v1247
    %v1816 = vpack.c.b16 %v1256, %v1248
    %v1817 = vpack.c.b16 %v1257, %v1249
    %v1818 = vpack.c.b16 %v1266, %v1258
    %v1819 = vpack.c.b16 %v1267, %v1259
    %v1820 = vpack.c.b16 %v1268, %v1260
    %v1821 = vpack.c.b16 %v1269, %v1261
    %v1822 = vpack.c.b16 %v1270, %v1262
    %v1823 = vpack.c.b16 %v1271, %v1263
    %v1824 = vpack.c.b16 %v1272, %v1264
    %v1825 = vpack.c.b16 %v1273, %v1265
    %v1826 = vpack.c.b16 %v1282, %v1274
    %v1827 = vpack.c.b16 %v1283, %v1275
    %v1828 = vpack.c.b16 %v1284, %v1276
    %v1829 = vpack.c.b16 %v1285, %v1277
    %v1830 = vpack.c.b16 %v1286, %v1278
    %v1831 = vpack.c.b16 %v1287, %v1279
    %v1832 = vpack.c.b16 %v1288, %v1280
    %v1833 = vpack.c.b16 %v1289, %v1281
    %v1834 = vpack.c.b16 %v1298, %v1290
    %v1835 = vpack.c.b16 %v1299, %v1291
    %v1836 = vpack.c.b16 %v1300, %v1292
    %v1837 = vpack.c.b16 %v1301, %v1293
    %v1838 = vpack.c.b16 %v1302, %v1294
    %v1839 = vpack.c.b16 %v1303, %v1295
    %v1840 = vpack.c.b16 %v1304, %v1296
    %v1841 = vpack.c.b16 %v1305, %v1297
    %v1842 = vpack.c.b16 %v1314, %v1306
    %v1843 = vpack.c.b16 %v1315, %v1307
    %v1844 = vpack.c.b16 %v1316, %v1308
    %v1845 = vpack.c.b16 %v1317, %v1309
    %v1846 = vpack.c.b16 %v1318, %v1310
    %v1847 = vpack.c.b16 %v1319, %v1311
    %v1848 = vpack.c.b16 %v1320, %v1312
    %v1849 = vpack.c.b16 %v1321, %v1313
    %v1850 = vpack.c.b16 %v1330, %v1322
    %v1851 = vpack.c.b16 %v1331, %v1323
    %v1852 = vpack.c.b16 %v1332, %v1324
    %v1853 = vpack.c.b16 %v1333, %v1325
    %v1854 = vpack.c.b16 %v1334, %v1326
    %v1855 = vpack.c.b16 %v1335, %v1327
    %v1856 = vpack.c.b16 %v1336, %v1328
    %v1857 = vpack.c.b16 %v1337, %v1329
    %v1858 = vpack.c.b16 %v1346, %v1338
    %v1859 = vpack.c.b16 %v1347, %v1339
    %v1860 = vpack.c.b16 %v1348, %v1340
    %v1861 = vpack.c.b16 %v1349, %v1341
    %v1862 = vpack.c.b16 %v1350, %v1342
    %v1863 = vpack.c.b16 %v1351, %v1343
    %v1864 = vpack.c.b16 %v1352, %v1344
    %v1865 = vpack.c.b16 %v1353, %v1345
    %v1866 = vpack.c.b16 %v1362, %v1354
    %v1867 = vpack.c.b16 %v1363, %v1355
    %v1868 = vpack.c.b16 %v1364, %v1356
    %v1869 = vpack.c.b16 %v1365, %v1357
    %v1870 = vpack.c.b16 %v1366, %v1358
    %v1871 = vpack.c.b16 %v1367, %v1359
    %v1872 = vpack.c.b16 %v1368, %v1360
    %v1873 = vpack.c.b16 %v1369, %v1361
    %v1874 = vpack.c.b16 %v1378, %v1370
    %v1875 = vpack.c.b16 %v1379, %v1371
    %v1876 = vpack.c.b16 %v1380, %v1372
    %v1877 = vpack.c.b16 %v1381, %v1373
    %v1878 = vpack.c.b16 %v1382, %v1374
    %v1879 = vpack.c.b16 %v1383, %v1375
    %v1880 = vpack.c.b16 %v1384, %v1376
    %v1881 = vpack.c.b16 %v1385, %v1377
    %v1882 = vpack.c.b16 %v1394, %v1386
    %v1883 = vpack.c.b16 %v1395, %v1387
    %v1884 = vpack.c.b16 %v1396, %v1388
    %v1885 = vpack.c.b16 %v1397, %v1389
    %v1886 = vpack.c.b16 %v1398, %v1390
    %v1887 = vpack.c.b16 %v1399, %v1391
    %v1888 = vpack.c.b16 %v1400, %v1392
    %v1889 = vpack.c.b16 %v1401, %v1393
    %v1890 = vpack.c.b16 %v1410, %v1402
    %v1891 = vpack.c.b16 %v1411, %v1403
    %v1892 = vpack.c.b16 %v1412, %v1404
    %v1893 = vpack.c.b16 %v1413, %v1405
    %v1894 = vpack.c.b16 %v1414, %v1406
    %v1895 = vpack.c.b16 %v1415, %v1407
    %v1896 = vpack.c.b16 %v1416, %v1408
    %v1897 = vpack.c.b16 %v1417, %v1409
    %v1898 = vpack.c.b16 %v1426, %v1418
    %v1899 = vpack.c.b16 %v1427, %v1419
    %v1900 = vpack.c.b16 %v1428, %v1420
    %v1901 = vpack.c.b16 %v1429, %v1421
    %v1902 = vpack.c.b16 %v1430, %v1422
    %v1903 = vpack.c.b16 %v1431, %v1423
    %v1904 = vpack.c.b16 %v1432, %v1424
    %v1905 = vpack.c.b16 %v1433, %v1425
    %v1906 = vpack.c.b16 %v1442, %v1434
    %v1907 = vpack.c.b16 %v1443, %v1435
    %v1908 = vpack.c.b16 %v1444, %v1436
    %v1909 = vpack.c.b16 %v1445, %v1437
    %v1910 = vpack.c.b16 %v1446, %v1438
    %v1911 = vpack.c.b16 %v1447, %v1439
    %v1912 = vpack.c.b16 %v1448, %v1440
    %v1913 = vpack.c.b16 %v1449, %v1441
    %v1914 = vpack.c.b16 %v1458, %v1450
    %v1915 = vpack.c.b16 %v1459, %v1451
    %v1916 = vpack.c.b16 %v1460, %v1452
    %v1917 = vpack.c.b16 %v1461, %v1453
    %v1918 = vpack.c.b16 %v1462, %v1454
    %v1919 = vpack.c.b16 %v1463, %v1455
    %v1920 = vpack.c.b16 %v1464, %v1456
    %v1921 = vpack.c.b16 %v1465, %v1457
    %v1922 = vpack.c.b16 %v1474, %v1466
    %v1923 = vpack.c.b16 %v1475, %v1467
    %v1924 = vpack.c.b16 %v1476, %v1468
    %v1925 = vpack.c.b16 %v1477, %v1469
    %v1926 = vpack.c.b16 %v1478, %v1470
    %v1927 = vpack.c.b16 %v1479, %v1471
    %v1928 = vpack.c.b16 %v1480, %v1472
    %v1929 = vpack.c.b16 %v1481, %v1473
    %v1930 = vpack.c.b16 %v1490, %v1482
    %v1931 = vpack.c.b16 %v1491, %v1483
    %v1932 = vpack.c.b16 %v1492, %v1484
    %v1933 = vpack.c.b16 %v1493, %v1485
    %v1934 = vpack.c.b16 %v1494, %v1486
    %v1935 = vpack.c.b16 %v1495, %v1487
    %v1936 = vpack.c.b16 %v1496, %v1488
    %v1937 = vpack.c.b16 %v1497, %v1489
    %v1938 = vpack.c.b16 %v1506, %v1498
    %v1939 = vpack.c.b16 %v1507, %v1499
    %v1940 = vpack.c.b16 %v1508, %v1500
    %v1941 = vpack.c.b16 %v1509, %v1501
    %v1942 = vpack.c.b16 %v1510, %v1502
    %v1943 = vpack.c.b16 %v1511, %v1503
    %v1944 = vpack.c.b16 %v1512, %v1504
    %v1945 = vpack.c.b16 %v1513, %v1505
    %v1946 = vpack.c.b16 %v1522, %v1514
    %v1947 = vpack.c.b16 %v1523, %v1515
    %v1948 = vpack.c.b16 %v1524, %v1516
    %v1949 = vpack.c.b16 %v1525, %v1517
    %v1950 = vpack.c.b16 %v1526, %v1518
    %v1951 = vpack.c.b16 %v1527, %v1519
    %v1952 = vpack.c.b16 %v1528, %v1520
    %v1953 = vpack.c.b16 %v1529, %v1521
    %v1954 = vpack.c.b16 %v1538, %v1530
    %v1955 = vpack.c.b16 %v1539, %v1531
    %v1956 = vpack.c.b16 %v1540, %v1532
    %v1957 = vpack.c.b16 %v1541, %v1533
    %v1958 = vpack.c.b16 %v1542, %v1534
    %v1959 = vpack.c.b16 %v1543, %v1535
    %v1960 = vpack.c.b16 %v1544, %v1536
    %v1961 = vpack.c.b16 %v1545, %v1537
    %v1962 = vpack.c.b16 %v1554, %v1546
    %v1963 = vpack.c.b16 %v1555, %v1547
    %v1964 = vpack.c.b16 %v1556, %v1548
    %v1965 = vpack.c.b16 %v1557, %v1549
    %v1966 = vpack.c.b16 %v1558, %v1550
    %v1967 = vpack.c.b16 %v1559, %v1551
    %v1968 = vpack.c.b16 %v1560, %v1552
    %v1969 = vpack.c.b16 %v1561, %v1553
    %v1970 = vpack.c.b16 %v1570, %v1562
    %v1971 = vpack.c.b16 %v1571, %v1563
    %v1972 = vpack.c.b16 %v1572, %v1564
    %v1973 = vpack.c.b16 %v1573, %v1565
    %v1974 = vpack.c.b16 %v1574, %v1566
    %v1975 = vpack.c.b16 %v1575, %v1567
    %v1976 = vpack.c.b16 %v1576, %v1568
    %v1977 = vpack.c.b16 %v1577, %v1569
    %v1978 = vpack.c.b16 %v1586, %v1578
    %v1979 = vpack.c.b16 %v1587, %v1579
    %v1980 = vpack.c.b16 %v1588, %v1580
    %v1981 = vpack.c.b16 %v1589, %v1581
    %v1982 = vpack.c.b16 %v1590, %v1582
    %v1983 = vpack.c.b16 %v1591, %v1583
    %v1984 = vpack.c.b16 %v1592, %v1584
    %v1985 = vpack.c.b16 %v1593, %v1585
    %v1986 = vpack.c.b16 %v1602, %v1594
    %v1987 = vpack.c.b16 %v1603, %v1595
    %v1988 = vpack.c.b16 %v1604, %v1596
    %v1989 = vpack.c.b16 %v1605, %v1597
    %v1990 = vpack.c.b16 %v1606, %v1598
    %v1991 = vpack.c.b16 %v1607, %v1599
    %v1992 = vpack.c.b16 %v1608, %v1600
    %v1993 = vpack.c.b16 %v1609, %v1601
    %v2379 = vperm.slane %v443, 0
    %v2380 = vperm.slane %v443, 1
    %v2381 = vperm.slane %v443, 2
    %v2382 = vperm.slane %v443, 3
    %v2383 = vperm.slane %v443, 4
    %v2384 = vperm.slane %v443, 5
    %v2385 = vperm.slane %v443, 6
    %v2386 = vperm.slane %v443, 7
    %2395 = vmatpush.bf16.msra.mxu0 %v1666
    %2396 = vmatpush.bf16.msra.mxu0 %v1658
    %2397 = vmatpush.bf16.msra.mxu0 %v1650
    %2398 = vmatpush.bf16.msra.mxu0 %v1642
    %2399 = vmatpush.bf16.msra.mxu0 %v1634
    %2400 = vmatpush.bf16.msra.mxu0 %v1626
    %2401 = vmatpush.bf16.msra.mxu0 %v1618
    %2402 = vmatpush.bf16.msra.mxu0 %v1610
    %2403 = vmatmul.bf16.gmra.mxu0 %v446
    %v2404 = vpop.f32.mrf.mxu0
    %v2405 = vadd.f32 %v2379, %v2404
    %v2406 = vpop.f32.mrf.mxu0
    %2407 = vdwg.mxu0
    %2408 = vmatpush.bf16.msra.mxu0 %v1730
    %2409 = vmatpush.bf16.msra.mxu0 %v1722
    %2410 = vmatpush.bf16.msra.mxu0 %v1714
    %2411 = vmatpush.bf16.msra.mxu0 %v1706
    %2412 = vmatpush.bf16.msra.mxu0 %v1698
    %2413 = vmatpush.bf16.msra.mxu0 %v1690
    %2414 = vmatpush.bf16.msra.mxu0 %v1682
    %2415 = vmatpush.bf16.msra.mxu0 %v1674
    %2416 = vmatmul.bf16.gmra.mxu0 %v447
    %v2417 = vpop.f32.mrf.mxu0
    %v2418 = vadd.f32 %v2405, %v2417
    %v2419 = vpop.f32.mrf.mxu0
    %2420 = vdwg.mxu0
    %2421 = vmatpush.bf16.msra.mxu0 %v1794
    %2422 = vmatpush.bf16.msra.mxu0 %v1786
    %2423 = vmatpush.bf16.msra.mxu0 %v1778
    %2424 = vmatpush.bf16.msra.mxu0 %v1770
    %2425 = vmatpush.bf16.msra.mxu0 %v1762
    %2426 = vmatpush.bf16.msra.mxu0 %v1754
    %2427 = vmatpush.bf16.msra.mxu0 %v1746
    %2428 = vmatpush.bf16.msra.mxu0 %v1738
    %2429 = vmatmul.bf16.gmra.mxu0 %v448
    %v2430 = vpop.f32.mrf.mxu0
    %v2431 = vadd.f32 %v2418, %v2430
    %v2432 = vpop.f32.mrf.mxu0
    %2433 = vdwg.mxu0
    %2434 = vmatpush.bf16.msra.mxu0 %v1858
    %2435 = vmatpush.bf16.msra.mxu0 %v1850
    %2436 = vmatpush.bf16.msra.mxu0 %v1842
    %2437 = vmatpush.bf16.msra.mxu0 %v1834
    %2438 = vmatpush.bf16.msra.mxu0 %v1826
    %2439 = vmatpush.bf16.msra.mxu0 %v1818
    %2440 = vmatpush.bf16.msra.mxu0 %v1810
    %2441 = vmatpush.bf16.msra.mxu0 %v1802
    %2442 = vmatmul.bf16.gmra.mxu0 %v449
    %v2443 = vpop.f32.mrf.mxu0
    %v2444 = vadd.f32 %v2431, %v2443
    %v2445 = vpop.f32.mrf.mxu0
    %2446 = vdwg.mxu0
    %2447 = vmatpush.bf16.msra.mxu0 %v1922
    %2448 = vmatpush.bf16.msra.mxu0 %v1914
    %2449 = vmatpush.bf16.msra.mxu0 %v1906
    %2450 = vmatpush.bf16.msra.mxu0 %v1898
    %2451 = vmatpush.bf16.msra.mxu0 %v1890
    %2452 = vmatpush.bf16.msra.mxu0 %v1882
    %2453 = vmatpush.bf16.msra.mxu0 %v1874
    %2454 = vmatpush.bf16.msra.mxu0 %v1866
    %2455 = vmatmul.bf16.gmra.mxu0 %v450
    %v2456 = vpop.f32.mrf.mxu0
    %v2457 = vadd.f32 %v2444, %v2456
    %v2458 = vpop.f32.mrf.mxu0
    %2459 = vdwg.mxu0
    %2460 = vmatpush.bf16.msra.mxu0 %v1986
    %2461 = vmatpush.bf16.msra.mxu0 %v1978
    %2462 = vmatpush.bf16.msra.mxu0 %v1970
    %2463 = vmatpush.bf16.msra.mxu0 %v1962
    %2464 = vmatpush.bf16.msra.mxu0 %v1954
    %2465 = vmatpush.bf16.msra.mxu0 %v1946
    %2466 = vmatpush.bf16.msra.mxu0 %v1938
    %2467 = vmatpush.bf16.msra.mxu0 %v1930
    %2468 = vmatmul.bf16.gmra.mxu0 %v451
    %v2469 = vpop.f32.mrf.mxu0
    %v2470 = vadd.f32 %v2457, %v2469
    %v2471 = vpop.f32.mrf.mxu0
    %2472 = vdwg.mxu0
    %2473 = vmatpush.bf16.msra.mxu0 %v1667
    %2474 = vmatpush.bf16.msra.mxu0 %v1659
    %2475 = vmatpush.bf16.msra.mxu0 %v1651
    %2476 = vmatpush.bf16.msra.mxu0 %v1643
    %2477 = vmatpush.bf16.msra.mxu0 %v1635
    %2478 = vmatpush.bf16.msra.mxu0 %v1627
    %2479 = vmatpush.bf16.msra.mxu0 %v1619
    %2480 = vmatpush.bf16.msra.mxu0 %v1611
    %2481 = vmatmul.bf16.gmra.mxu0 %v446
    %v2482 = vpop.f32.mrf.mxu0
    %v2483 = vadd.f32 %v2380, %v2482
    %v2484 = vpop.f32.mrf.mxu0
    %2485 = vdwg.mxu0
    %2486 = vmatpush.bf16.msra.mxu0 %v1731
    %2487 = vmatpush.bf16.msra.mxu0 %v1723
    %2488 = vmatpush.bf16.msra.mxu0 %v1715
    %2489 = vmatpush.bf16.msra.mxu0 %v1707
    %2490 = vmatpush.bf16.msra.mxu0 %v1699
    %2491 = vmatpush.bf16.msra.mxu0 %v1691
    %2492 = vmatpush.bf16.msra.mxu0 %v1683
    %2493 = vmatpush.bf16.msra.mxu0 %v1675
    %2494 = vmatmul.bf16.gmra.mxu0 %v447
    %v2495 = vpop.f32.mrf.mxu0
    %v2496 = vadd.f32 %v2483, %v2495
    %v2497 = vpop.f32.mrf.mxu0
    %2498 = vdwg.mxu0
    %2499 = vmatpush.bf16.msra.mxu0 %v1795
    %2500 = vmatpush.bf16.msra.mxu0 %v1787
    %2501 = vmatpush.bf16.msra.mxu0 %v1779
    %2502 = vmatpush.bf16.msra.mxu0 %v1771
    %2503 = vmatpush.bf16.msra.mxu0 %v1763
    %2504 = vmatpush.bf16.msra.mxu0 %v1755
    %2505 = vmatpush.bf16.msra.mxu0 %v1747
    %2506 = vmatpush.bf16.msra.mxu0 %v1739
    %2507 = vmatmul.bf16.gmra.mxu0 %v448
    %v2508 = vpop.f32.mrf.mxu0
    %v2509 = vadd.f32 %v2496, %v2508
    %v2510 = vpop.f32.mrf.mxu0
    %2511 = vdwg.mxu0
    %2512 = vmatpush.bf16.msra.mxu0 %v1859
    %2513 = vmatpush.bf16.msra.mxu0 %v1851
    %2514 = vmatpush.bf16.msra.mxu0 %v1843
    %2515 = vmatpush.bf16.msra.mxu0 %v1835
    %2516 = vmatpush.bf16.msra.mxu0 %v1827
    %2517 = vmatpush.bf16.msra.mxu0 %v1819
    %2518 = vmatpush.bf16.msra.mxu0 %v1811
    %2519 = vmatpush.bf16.msra.mxu0 %v1803
    %2520 = vmatmul.bf16.gmra.mxu0 %v449
    %v2521 = vpop.f32.mrf.mxu0
    %v2522 = vadd.f32 %v2509, %v2521
    %v2523 = vpop.f32.mrf.mxu0
    %2524 = vdwg.mxu0
    %2525 = vmatpush.bf16.msra.mxu0 %v1923
    %2526 = vmatpush.bf16.msra.mxu0 %v1915
    %2527 = vmatpush.bf16.msra.mxu0 %v1907
    %2528 = vmatpush.bf16.msra.mxu0 %v1899
    %2529 = vmatpush.bf16.msra.mxu0 %v1891
    %2530 = vmatpush.bf16.msra.mxu0 %v1883
    %2531 = vmatpush.bf16.msra.mxu0 %v1875
    %2532 = vmatpush.bf16.msra.mxu0 %v1867
    %2533 = vmatmul.bf16.gmra.mxu0 %v450
    %v2534 = vpop.f32.mrf.mxu0
    %v2535 = vadd.f32 %v2522, %v2534
    %v2536 = vpop.f32.mrf.mxu0
    %2537 = vdwg.mxu0
    %2538 = vmatpush.bf16.msra.mxu0 %v1987
    %2539 = vmatpush.bf16.msra.mxu0 %v1979
    %2540 = vmatpush.bf16.msra.mxu0 %v1971
    %2541 = vmatpush.bf16.msra.mxu0 %v1963
    %2542 = vmatpush.bf16.msra.mxu0 %v1955
    %2543 = vmatpush.bf16.msra.mxu0 %v1947
    %2544 = vmatpush.bf16.msra.mxu0 %v1939
    %2545 = vmatpush.bf16.msra.mxu0 %v1931
    %2546 = vmatmul.bf16.gmra.mxu0 %v451
    %v2547 = vpop.f32.mrf.mxu0
    %v2548 = vadd.f32 %v2535, %v2547
    %v2549 = vpop.f32.mrf.mxu0
    %2550 = vdwg.mxu0
    %2551 = vmatpush.bf16.msra.mxu0 %v1668
    %2552 = vmatpush.bf16.msra.mxu0 %v1660
    %2553 = vmatpush.bf16.msra.mxu0 %v1652
    %2554 = vmatpush.bf16.msra.mxu0 %v1644
    %2555 = vmatpush.bf16.msra.mxu0 %v1636
    %2556 = vmatpush.bf16.msra.mxu0 %v1628
    %2557 = vmatpush.bf16.msra.mxu0 %v1620
    %2558 = vmatpush.bf16.msra.mxu0 %v1612
    %2559 = vmatmul.bf16.gmra.mxu0 %v446
    %v2560 = vpop.f32.mrf.mxu0
    %v2561 = vadd.f32 %v2381, %v2560
    %v2562 = vpop.f32.mrf.mxu0
    %2563 = vdwg.mxu0
    %2564 = vmatpush.bf16.msra.mxu0 %v1732
    %2565 = vmatpush.bf16.msra.mxu0 %v1724
    %2566 = vmatpush.bf16.msra.mxu0 %v1716
    %2567 = vmatpush.bf16.msra.mxu0 %v1708
    %2568 = vmatpush.bf16.msra.mxu0 %v1700
    %2569 = vmatpush.bf16.msra.mxu0 %v1692
    %2570 = vmatpush.bf16.msra.mxu0 %v1684
    %2571 = vmatpush.bf16.msra.mxu0 %v1676
    %2572 = vmatmul.bf16.gmra.mxu0 %v447
    %v2573 = vpop.f32.mrf.mxu0
    %v2574 = vadd.f32 %v2561, %v2573
    %v2575 = vpop.f32.mrf.mxu0
    %2576 = vdwg.mxu0
    %2577 = vmatpush.bf16.msra.mxu0 %v1796
    %2578 = vmatpush.bf16.msra.mxu0 %v1788
    %2579 = vmatpush.bf16.msra.mxu0 %v1780
    %2580 = vmatpush.bf16.msra.mxu0 %v1772
    %2581 = vmatpush.bf16.msra.mxu0 %v1764
    %2582 = vmatpush.bf16.msra.mxu0 %v1756
    %2583 = vmatpush.bf16.msra.mxu0 %v1748
    %2584 = vmatpush.bf16.msra.mxu0 %v1740
    %2585 = vmatmul.bf16.gmra.mxu0 %v448
    %v2586 = vpop.f32.mrf.mxu0
    %v2587 = vadd.f32 %v2574, %v2586
    %v2588 = vpop.f32.mrf.mxu0
    %2589 = vdwg.mxu0
    %2590 = vmatpush.bf16.msra.mxu0 %v1860
    %2591 = vmatpush.bf16.msra.mxu0 %v1852
    %2592 = vmatpush.bf16.msra.mxu0 %v1844
    %2593 = vmatpush.bf16.msra.mxu0 %v1836
    %2594 = vmatpush.bf16.msra.mxu0 %v1828
    %2595 = vmatpush.bf16.msra.mxu0 %v1820
    %2596 = vmatpush.bf16.msra.mxu0 %v1812
    %2597 = vmatpush.bf16.msra.mxu0 %v1804
    %2598 = vmatmul.bf16.gmra.mxu0 %v449
    %v2599 = vpop.f32.mrf.mxu0
    %v2600 = vadd.f32 %v2587, %v2599
    %v2601 = vpop.f32.mrf.mxu0
    %2602 = vdwg.mxu0
    %2603 = vmatpush.bf16.msra.mxu0 %v1924
    %2604 = vmatpush.bf16.msra.mxu0 %v1916
    %2605 = vmatpush.bf16.msra.mxu0 %v1908
    %2606 = vmatpush.bf16.msra.mxu0 %v1900
    %2607 = vmatpush.bf16.msra.mxu0 %v1892
    %2608 = vmatpush.bf16.msra.mxu0 %v1884
    %2609 = vmatpush.bf16.msra.mxu0 %v1876
    %2610 = vmatpush.bf16.msra.mxu0 %v1868
    %2611 = vmatmul.bf16.gmra.mxu0 %v450
    %v2612 = vpop.f32.mrf.mxu0
    %v2613 = vadd.f32 %v2600, %v2612
    %v2614 = vpop.f32.mrf.mxu0
    %2615 = vdwg.mxu0
    %2616 = vmatpush.bf16.msra.mxu0 %v1988
    %2617 = vmatpush.bf16.msra.mxu0 %v1980
    %2618 = vmatpush.bf16.msra.mxu0 %v1972
    %2619 = vmatpush.bf16.msra.mxu0 %v1964
    %2620 = vmatpush.bf16.msra.mxu0 %v1956
    %2621 = vmatpush.bf16.msra.mxu0 %v1948
    %2622 = vmatpush.bf16.msra.mxu0 %v1940
    %2623 = vmatpush.bf16.msra.mxu0 %v1932
    %2624 = vmatmul.bf16.gmra.mxu0 %v451
    %v2625 = vpop.f32.mrf.mxu0
    %v2626 = vadd.f32 %v2613, %v2625
    %v2627 = vpop.f32.mrf.mxu0
    %2628 = vdwg.mxu0
    %2629 = vmatpush.bf16.msra.mxu0 %v1669
    %2630 = vmatpush.bf16.msra.mxu0 %v1661
    %2631 = vmatpush.bf16.msra.mxu0 %v1653
    %2632 = vmatpush.bf16.msra.mxu0 %v1645
    %2633 = vmatpush.bf16.msra.mxu0 %v1637
    %2634 = vmatpush.bf16.msra.mxu0 %v1629
    %2635 = vmatpush.bf16.msra.mxu0 %v1621
    %2636 = vmatpush.bf16.msra.mxu0 %v1613
    %2637 = vmatmul.bf16.gmra.mxu0 %v446
    %v2638 = vpop.f32.mrf.mxu0
    %v2639 = vadd.f32 %v2382, %v2638
    %v2640 = vpop.f32.mrf.mxu0
    %2641 = vdwg.mxu0
    %2642 = vmatpush.bf16.msra.mxu0 %v1733
    %2643 = vmatpush.bf16.msra.mxu0 %v1725
    %2644 = vmatpush.bf16.msra.mxu0 %v1717
    %2645 = vmatpush.bf16.msra.mxu0 %v1709
    %2646 = vmatpush.bf16.msra.mxu0 %v1701
    %2647 = vmatpush.bf16.msra.mxu0 %v1693
    %2648 = vmatpush.bf16.msra.mxu0 %v1685
    %2649 = vmatpush.bf16.msra.mxu0 %v1677
    %2650 = vmatmul.bf16.gmra.mxu0 %v447
    %v2651 = vpop.f32.mrf.mxu0
    %v2652 = vadd.f32 %v2639, %v2651
    %v2653 = vpop.f32.mrf.mxu0
    %2654 = vdwg.mxu0
    %2655 = vmatpush.bf16.msra.mxu0 %v1797
    %2656 = vmatpush.bf16.msra.mxu0 %v1789
    %2657 = vmatpush.bf16.msra.mxu0 %v1781
    %2658 = vmatpush.bf16.msra.mxu0 %v1773
    %2659 = vmatpush.bf16.msra.mxu0 %v1765
    %2660 = vmatpush.bf16.msra.mxu0 %v1757
    %2661 = vmatpush.bf16.msra.mxu0 %v1749
    %2662 = vmatpush.bf16.msra.mxu0 %v1741
    %2663 = vmatmul.bf16.gmra.mxu0 %v448
    %v2664 = vpop.f32.mrf.mxu0
    %v2665 = vadd.f32 %v2652, %v2664
    %v2666 = vpop.f32.mrf.mxu0
    %2667 = vdwg.mxu0
    %2668 = vmatpush.bf16.msra.mxu0 %v1861
    %2669 = vmatpush.bf16.msra.mxu0 %v1853
    %2670 = vmatpush.bf16.msra.mxu0 %v1845
    %2671 = vmatpush.bf16.msra.mxu0 %v1837
    %2672 = vmatpush.bf16.msra.mxu0 %v1829
    %2673 = vmatpush.bf16.msra.mxu0 %v1821
    %2674 = vmatpush.bf16.msra.mxu0 %v1813
    %2675 = vmatpush.bf16.msra.mxu0 %v1805
    %2676 = vmatmul.bf16.gmra.mxu0 %v449
    %v2677 = vpop.f32.mrf.mxu0
    %v2678 = vadd.f32 %v2665, %v2677
    %v2679 = vpop.f32.mrf.mxu0
    %2680 = vdwg.mxu0
    %2681 = vmatpush.bf16.msra.mxu0 %v1925
    %2682 = vmatpush.bf16.msra.mxu0 %v1917
    %2683 = vmatpush.bf16.msra.mxu0 %v1909
    %2684 = vmatpush.bf16.msra.mxu0 %v1901
    %2685 = vmatpush.bf16.msra.mxu0 %v1893
    %2686 = vmatpush.bf16.msra.mxu0 %v1885
    %2687 = vmatpush.bf16.msra.mxu0 %v1877
    %2688 = vmatpush.bf16.msra.mxu0 %v1869
    %2689 = vmatmul.bf16.gmra.mxu0 %v450
    %v2690 = vpop.f32.mrf.mxu0
    %v2691 = vadd.f32 %v2678, %v2690
    %v2692 = vpop.f32.mrf.mxu0
    %2693 = vdwg.mxu0
    %2694 = vmatpush.bf16.msra.mxu0 %v1989
    %2695 = vmatpush.bf16.msra.mxu0 %v1981
    %2696 = vmatpush.bf16.msra.mxu0 %v1973
    %2697 = vmatpush.bf16.msra.mxu0 %v1965
    %2698 = vmatpush.bf16.msra.mxu0 %v1957
    %2699 = vmatpush.bf16.msra.mxu0 %v1949
    %2700 = vmatpush.bf16.msra.mxu0 %v1941
    %2701 = vmatpush.bf16.msra.mxu0 %v1933
    %2702 = vmatmul.bf16.gmra.mxu0 %v451
    %v2703 = vpop.f32.mrf.mxu0
    %v2704 = vadd.f32 %v2691, %v2703
    %v2705 = vpop.f32.mrf.mxu0
    %2706 = vdwg.mxu0
    %2707 = vmatpush.bf16.msra.mxu0 %v1670
    %2708 = vmatpush.bf16.msra.mxu0 %v1662
    %2709 = vmatpush.bf16.msra.mxu0 %v1654
    %2710 = vmatpush.bf16.msra.mxu0 %v1646
    %2711 = vmatpush.bf16.msra.mxu0 %v1638
    %2712 = vmatpush.bf16.msra.mxu0 %v1630
    %2713 = vmatpush.bf16.msra.mxu0 %v1622
    %2714 = vmatpush.bf16.msra.mxu0 %v1614
    %2715 = vmatmul.bf16.gmra.mxu0 %v446
    %v2716 = vpop.f32.mrf.mxu0
    %v2717 = vadd.f32 %v2383, %v2716
    %v2718 = vpop.f32.mrf.mxu0
    %2719 = vdwg.mxu0
    %2720 = vmatpush.bf16.msra.mxu0 %v1734
    %2721 = vmatpush.bf16.msra.mxu0 %v1726
    %2722 = vmatpush.bf16.msra.mxu0 %v1718
    %2723 = vmatpush.bf16.msra.mxu0 %v1710
    %2724 = vmatpush.bf16.msra.mxu0 %v1702
    %2725 = vmatpush.bf16.msra.mxu0 %v1694
    %2726 = vmatpush.bf16.msra.mxu0 %v1686
    %2727 = vmatpush.bf16.msra.mxu0 %v1678
    %2728 = vmatmul.bf16.gmra.mxu0 %v447
    %v2729 = vpop.f32.mrf.mxu0
    %v2730 = vadd.f32 %v2717, %v2729
    %v2731 = vpop.f32.mrf.mxu0
    %2732 = vdwg.mxu0
    %2733 = vmatpush.bf16.msra.mxu0 %v1798
    %2734 = vmatpush.bf16.msra.mxu0 %v1790
    %2735 = vmatpush.bf16.msra.mxu0 %v1782
    %2736 = vmatpush.bf16.msra.mxu0 %v1774
    %2737 = vmatpush.bf16.msra.mxu0 %v1766
    %2738 = vmatpush.bf16.msra.mxu0 %v1758
    %2739 = vmatpush.bf16.msra.mxu0 %v1750
    %2740 = vmatpush.bf16.msra.mxu0 %v1742
    %2741 = vmatmul.bf16.gmra.mxu0 %v448
    %v2742 = vpop.f32.mrf.mxu0
    %v2743 = vadd.f32 %v2730, %v2742
    %v2744 = vpop.f32.mrf.mxu0
    %2745 = vdwg.mxu0
    %2746 = vmatpush.bf16.msra.mxu0 %v1862
    %2747 = vmatpush.bf16.msra.mxu0 %v1854
    %2748 = vmatpush.bf16.msra.mxu0 %v1846
    %2749 = vmatpush.bf16.msra.mxu0 %v1838
    %2750 = vmatpush.bf16.msra.mxu0 %v1830
    %2751 = vmatpush.bf16.msra.mxu0 %v1822
    %2752 = vmatpush.bf16.msra.mxu0 %v1814
    %2753 = vmatpush.bf16.msra.mxu0 %v1806
    %2754 = vmatmul.bf16.gmra.mxu0 %v449
    %v2755 = vpop.f32.mrf.mxu0
    %v2756 = vadd.f32 %v2743, %v2755
    %v2757 = vpop.f32.mrf.mxu0
    %2758 = vdwg.mxu0
    %2759 = vmatpush.bf16.msra.mxu0 %v1926
    %2760 = vmatpush.bf16.msra.mxu0 %v1918
    %2761 = vmatpush.bf16.msra.mxu0 %v1910
    %2762 = vmatpush.bf16.msra.mxu0 %v1902
    %2763 = vmatpush.bf16.msra.mxu0 %v1894
    %2764 = vmatpush.bf16.msra.mxu0 %v1886
    %2765 = vmatpush.bf16.msra.mxu0 %v1878
    %2766 = vmatpush.bf16.msra.mxu0 %v1870
    %2767 = vmatmul.bf16.gmra.mxu0 %v450
    %v2768 = vpop.f32.mrf.mxu0
    %v2769 = vadd.f32 %v2756, %v2768
    %v2770 = vpop.f32.mrf.mxu0
    %2771 = vdwg.mxu0
    %2772 = vmatpush.bf16.msra.mxu0 %v1990
    %2773 = vmatpush.bf16.msra.mxu0 %v1982
    %2774 = vmatpush.bf16.msra.mxu0 %v1974
    %2775 = vmatpush.bf16.msra.mxu0 %v1966
    %2776 = vmatpush.bf16.msra.mxu0 %v1958
    %2777 = vmatpush.bf16.msra.mxu0 %v1950
    %2778 = vmatpush.bf16.msra.mxu0 %v1942
    %2779 = vmatpush.bf16.msra.mxu0 %v1934
    %2780 = vmatmul.bf16.gmra.mxu0 %v451
    %v2781 = vpop.f32.mrf.mxu0
    %v2782 = vadd.f32 %v2769, %v2781
    %v2783 = vpop.f32.mrf.mxu0
    %2784 = vdwg.mxu0
    %2785 = vmatpush.bf16.msra.mxu0 %v1671
    %2786 = vmatpush.bf16.msra.mxu0 %v1663
    %2787 = vmatpush.bf16.msra.mxu0 %v1655
    %2788 = vmatpush.bf16.msra.mxu0 %v1647
    %2789 = vmatpush.bf16.msra.mxu0 %v1639
    %2790 = vmatpush.bf16.msra.mxu0 %v1631
    %2791 = vmatpush.bf16.msra.mxu0 %v1623
    %2792 = vmatpush.bf16.msra.mxu0 %v1615
    %2793 = vmatmul.bf16.gmra.mxu0 %v446
    %v2794 = vpop.f32.mrf.mxu0
    %v2795 = vadd.f32 %v2384, %v2794
    %v2796 = vpop.f32.mrf.mxu0
    %2797 = vdwg.mxu0
    %2798 = vmatpush.bf16.msra.mxu0 %v1735
    %2799 = vmatpush.bf16.msra.mxu0 %v1727
    %2800 = vmatpush.bf16.msra.mxu0 %v1719
    %2801 = vmatpush.bf16.msra.mxu0 %v1711
    %2802 = vmatpush.bf16.msra.mxu0 %v1703
    %2803 = vmatpush.bf16.msra.mxu0 %v1695
    %2804 = vmatpush.bf16.msra.mxu0 %v1687
    %2805 = vmatpush.bf16.msra.mxu0 %v1679
    %2806 = vmatmul.bf16.gmra.mxu0 %v447
    %v2807 = vpop.f32.mrf.mxu0
    %v2808 = vadd.f32 %v2795, %v2807
    %v2809 = vpop.f32.mrf.mxu0
    %2810 = vdwg.mxu0
    %2811 = vmatpush.bf16.msra.mxu0 %v1799
    %2812 = vmatpush.bf16.msra.mxu0 %v1791
    %2813 = vmatpush.bf16.msra.mxu0 %v1783
    %2814 = vmatpush.bf16.msra.mxu0 %v1775
    %2815 = vmatpush.bf16.msra.mxu0 %v1767
    %2816 = vmatpush.bf16.msra.mxu0 %v1759
    %2817 = vmatpush.bf16.msra.mxu0 %v1751
    %2818 = vmatpush.bf16.msra.mxu0 %v1743
    %2819 = vmatmul.bf16.gmra.mxu0 %v448
    %v2820 = vpop.f32.mrf.mxu0
    %v2821 = vadd.f32 %v2808, %v2820
    %v2822 = vpop.f32.mrf.mxu0
    %2823 = vdwg.mxu0
    %2824 = vmatpush.bf16.msra.mxu0 %v1863
    %2825 = vmatpush.bf16.msra.mxu0 %v1855
    %2826 = vmatpush.bf16.msra.mxu0 %v1847
    %2827 = vmatpush.bf16.msra.mxu0 %v1839
    %2828 = vmatpush.bf16.msra.mxu0 %v1831
    %2829 = vmatpush.bf16.msra.mxu0 %v1823
    %2830 = vmatpush.bf16.msra.mxu0 %v1815
    %2831 = vmatpush.bf16.msra.mxu0 %v1807
    %2832 = vmatmul.bf16.gmra.mxu0 %v449
    %v2833 = vpop.f32.mrf.mxu0
    %v2834 = vadd.f32 %v2821, %v2833
    %v2835 = vpop.f32.mrf.mxu0
    %2836 = vdwg.mxu0
    %2837 = vmatpush.bf16.msra.mxu0 %v1927
    %2838 = vmatpush.bf16.msra.mxu0 %v1919
    %2839 = vmatpush.bf16.msra.mxu0 %v1911
    %2840 = vmatpush.bf16.msra.mxu0 %v1903
    %2841 = vmatpush.bf16.msra.mxu0 %v1895
    %2842 = vmatpush.bf16.msra.mxu0 %v1887
    %2843 = vmatpush.bf16.msra.mxu0 %v1879
    %2844 = vmatpush.bf16.msra.mxu0 %v1871
    %2845 = vmatmul.bf16.gmra.mxu0 %v450
    %v2846 = vpop.f32.mrf.mxu0
    %v2847 = vadd.f32 %v2834, %v2846
    %v2848 = vpop.f32.mrf.mxu0
    %2849 = vdwg.mxu0
    %2850 = vmatpush.bf16.msra.mxu0 %v1991
    %2851 = vmatpush.bf16.msra.mxu0 %v1983
    %2852 = vmatpush.bf16.msra.mxu0 %v1975
    %2853 = vmatpush.bf16.msra.mxu0 %v1967
    %2854 = vmatpush.bf16.msra.mxu0 %v1959
    %2855 = vmatpush.bf16.msra.mxu0 %v1951
    %2856 = vmatpush.bf16.msra.mxu0 %v1943
    %2857 = vmatpush.bf16.msra.mxu0 %v1935
    %2858 = vmatmul.bf16.gmra.mxu0 %v451
    %v2859 = vpop.f32.mrf.mxu0
    %v2860 = vadd.f32 %v2847, %v2859
    %v2861 = vpop.f32.mrf.mxu0
    %2862 = vdwg.mxu0
    %2863 = vmatpush.bf16.msra.mxu0 %v1672
    %2864 = vmatpush.bf16.msra.mxu0 %v1664
    %2865 = vmatpush.bf16.msra.mxu0 %v1656
    %2866 = vmatpush.bf16.msra.mxu0 %v1648
    %2867 = vmatpush.bf16.msra.mxu0 %v1640
    %2868 = vmatpush.bf16.msra.mxu0 %v1632
    %2869 = vmatpush.bf16.msra.mxu0 %v1624
    %2870 = vmatpush.bf16.msra.mxu0 %v1616
    %2871 = vmatmul.bf16.gmra.mxu0 %v446
    %v2872 = vpop.f32.mrf.mxu0
    %v2873 = vadd.f32 %v2385, %v2872
    %v2874 = vpop.f32.mrf.mxu0
    %2875 = vdwg.mxu0
    %2876 = vmatpush.bf16.msra.mxu0 %v1736
    %2877 = vmatpush.bf16.msra.mxu0 %v1728
    %2878 = vmatpush.bf16.msra.mxu0 %v1720
    %2879 = vmatpush.bf16.msra.mxu0 %v1712
    %2880 = vmatpush.bf16.msra.mxu0 %v1704
    %2881 = vmatpush.bf16.msra.mxu0 %v1696
    %2882 = vmatpush.bf16.msra.mxu0 %v1688
    %2883 = vmatpush.bf16.msra.mxu0 %v1680
    %2884 = vmatmul.bf16.gmra.mxu0 %v447
    %v2885 = vpop.f32.mrf.mxu0
    %v2886 = vadd.f32 %v2873, %v2885
    %v2887 = vpop.f32.mrf.mxu0
    %2888 = vdwg.mxu0
    %2889 = vmatpush.bf16.msra.mxu0 %v1800
    %2890 = vmatpush.bf16.msra.mxu0 %v1792
    %2891 = vmatpush.bf16.msra.mxu0 %v1784
    %2892 = vmatpush.bf16.msra.mxu0 %v1776
    %2893 = vmatpush.bf16.msra.mxu0 %v1768
    %2894 = vmatpush.bf16.msra.mxu0 %v1760
    %2895 = vmatpush.bf16.msra.mxu0 %v1752
    %2896 = vmatpush.bf16.msra.mxu0 %v1744
    %2897 = vmatmul.bf16.gmra.mxu0 %v448
    %v2898 = vpop.f32.mrf.mxu0
    %v2899 = vadd.f32 %v2886, %v2898
    %v2900 = vpop.f32.mrf.mxu0
    %2901 = vdwg.mxu0
    %2902 = vmatpush.bf16.msra.mxu0 %v1864
    %2903 = vmatpush.bf16.msra.mxu0 %v1856
    %2904 = vmatpush.bf16.msra.mxu0 %v1848
    %2905 = vmatpush.bf16.msra.mxu0 %v1840
    %2906 = vmatpush.bf16.msra.mxu0 %v1832
    %2907 = vmatpush.bf16.msra.mxu0 %v1824
    %2908 = vmatpush.bf16.msra.mxu0 %v1816
    %2909 = vmatpush.bf16.msra.mxu0 %v1808
    %2910 = vmatmul.bf16.gmra.mxu0 %v449
    %v2911 = vpop.f32.mrf.mxu0
    %v2912 = vadd.f32 %v2899, %v2911
    %v2913 = vpop.f32.mrf.mxu0
    %2914 = vdwg.mxu0
    %2915 = vmatpush.bf16.msra.mxu0 %v1928
    %2916 = vmatpush.bf16.msra.mxu0 %v1920
    %2917 = vmatpush.bf16.msra.mxu0 %v1912
    %2918 = vmatpush.bf16.msra.mxu0 %v1904
    %2919 = vmatpush.bf16.msra.mxu0 %v1896
    %2920 = vmatpush.bf16.msra.mxu0 %v1888
    %2921 = vmatpush.bf16.msra.mxu0 %v1880
    %2922 = vmatpush.bf16.msra.mxu0 %v1872
    %2923 = vmatmul.bf16.gmra.mxu0 %v450
    %v2924 = vpop.f32.mrf.mxu0
    %v2925 = vadd.f32 %v2912, %v2924
    %v2926 = vpop.f32.mrf.mxu0
    %2927 = vdwg.mxu0
    %2928 = vmatpush.bf16.msra.mxu0 %v1992
    %2929 = vmatpush.bf16.msra.mxu0 %v1984
    %2930 = vmatpush.bf16.msra.mxu0 %v1976
    %2931 = vmatpush.bf16.msra.mxu0 %v1968
    %2932 = vmatpush.bf16.msra.mxu0 %v1960
    %2933 = vmatpush.bf16.msra.mxu0 %v1952
    %2934 = vmatpush.bf16.msra.mxu0 %v1944
    %2935 = vmatpush.bf16.msra.mxu0 %v1936
    %2936 = vmatmul.bf16.gmra.mxu0 %v451
    %v2937 = vpop.f32.mrf.mxu0
    %v2938 = vadd.f32 %v2925, %v2937
    %v2939 = vpop.f32.mrf.mxu0
    %2940 = vdwg.mxu0
    %2941 = vmatpush.bf16.msra.mxu0 %v1673
    %2942 = vmatpush.bf16.msra.mxu0 %v1665
    %2943 = vmatpush.bf16.msra.mxu0 %v1657
    %2944 = vmatpush.bf16.msra.mxu0 %v1649
    %2945 = vmatpush.bf16.msra.mxu0 %v1641
    %2946 = vmatpush.bf16.msra.mxu0 %v1633
    %2947 = vmatpush.bf16.msra.mxu0 %v1625
    %2948 = vmatpush.bf16.msra.mxu0 %v1617
    %2949 = vmatmul.bf16.gmra.mxu0 %v446
    %v2950 = vpop.f32.mrf.mxu0
    %v2951 = vadd.f32 %v2386, %v2950
    %v2952 = vpop.f32.mrf.mxu0
    %2953 = vdwg.mxu0
    %2954 = vmatpush.bf16.msra.mxu0 %v1737
    %2955 = vmatpush.bf16.msra.mxu0 %v1729
    %2956 = vmatpush.bf16.msra.mxu0 %v1721
    %2957 = vmatpush.bf16.msra.mxu0 %v1713
    %2958 = vmatpush.bf16.msra.mxu0 %v1705
    %2959 = vmatpush.bf16.msra.mxu0 %v1697
    %2960 = vmatpush.bf16.msra.mxu0 %v1689
    %2961 = vmatpush.bf16.msra.mxu0 %v1681
    %2962 = vmatmul.bf16.gmra.mxu0 %v447
    %v2963 = vpop.f32.mrf.mxu0
    %v2964 = vadd.f32 %v2951, %v2963
    %v2965 = vpop.f32.mrf.mxu0
    %2966 = vdwg.mxu0
    %2967 = vmatpush.bf16.msra.mxu0 %v1801
    %2968 = vmatpush.bf16.msra.mxu0 %v1793
    %2969 = vmatpush.bf16.msra.mxu0 %v1785
    %2970 = vmatpush.bf16.msra.mxu0 %v1777
    %2971 = vmatpush.bf16.msra.mxu0 %v1769
    %2972 = vmatpush.bf16.msra.mxu0 %v1761
    %2973 = vmatpush.bf16.msra.mxu0 %v1753
    %2974 = vmatpush.bf16.msra.mxu0 %v1745
    %2975 = vmatmul.bf16.gmra.mxu0 %v448
    %v2976 = vpop.f32.mrf.mxu0
    %v2977 = vadd.f32 %v2964, %v2976
    %v2978 = vpop.f32.mrf.mxu0
    %2979 = vdwg.mxu0
    %2980 = vmatpush.bf16.msra.mxu0 %v1865
    %2981 = vmatpush.bf16.msra.mxu0 %v1857
    %2982 = vmatpush.bf16.msra.mxu0 %v1849
    %2983 = vmatpush.bf16.msra.mxu0 %v1841
    %2984 = vmatpush.bf16.msra.mxu0 %v1833
    %2985 = vmatpush.bf16.msra.mxu0 %v1825
    %2986 = vmatpush.bf16.msra.mxu0 %v1817
    %2987 = vmatpush.bf16.msra.mxu0 %v1809
    %2988 = vmatmul.bf16.gmra.mxu0 %v449
    %v2989 = vpop.f32.mrf.mxu0
    %v2990 = vadd.f32 %v2977, %v2989
    %v2991 = vpop.f32.mrf.mxu0
    %2992 = vdwg.mxu0
    %2993 = vmatpush.bf16.msra.mxu0 %v1929
    %2994 = vmatpush.bf16.msra.mxu0 %v1921
    %2995 = vmatpush.bf16.msra.mxu0 %v1913
    %2996 = vmatpush.bf16.msra.mxu0 %v1905
    %2997 = vmatpush.bf16.msra.mxu0 %v1897
    %2998 = vmatpush.bf16.msra.mxu0 %v1889
    %2999 = vmatpush.bf16.msra.mxu0 %v1881
    %3000 = vmatpush.bf16.msra.mxu0 %v1873
    %3001 = vmatmul.bf16.gmra.mxu0 %v450
    %v3002 = vpop.f32.mrf.mxu0
    %v3003 = vadd.f32 %v2990, %v3002
    %v3004 = vpop.f32.mrf.mxu0
    %3005 = vdwg.mxu0
    %3006 = vmatpush.bf16.msra.mxu0 %v1993
    %3007 = vmatpush.bf16.msra.mxu0 %v1985
    %3008 = vmatpush.bf16.msra.mxu0 %v1977
    %3009 = vmatpush.bf16.msra.mxu0 %v1969
    %3010 = vmatpush.bf16.msra.mxu0 %v1961
    %3011 = vmatpush.bf16.msra.mxu0 %v1953
    %3012 = vmatpush.bf16.msra.mxu0 %v1945
    %3013 = vmatpush.bf16.msra.mxu0 %v1937
    %3014 = vmatmul.bf16.gmra.mxu0 %v451
    %v3015 = vpop.f32.mrf.mxu0
    %v3016 = vadd.f32 %v3003, %v3015
    %v3017 = vpop.f32.mrf.mxu0
    %3018 = vdwg.mxu0
    %v3027 = vrot.slane %v2548, 7
    %v3028 = vrot.slane %v2626, 6
    %v3029 = vrot.slane %v2704, 5
    %v3030 = vrot.slane %v2782, 4
    %v3031 = vrot.slane %v2860, 3
    %v3032 = vrot.slane %v2938, 2
    %v3033 = vrot.slane %v3016, 1
    %vm3034 = vcmask 1040384
    %v3035 = vsel %vm3034, %v2470, %v3027
    %vm3036 = vcmask 1042434
    %v3037 = vsel %vm3036, %v3028, %v3029
    %vm3038 = vcmask 1041408
    %v3039 = vsel %vm3038, %v3035, %v3037
    %vm3040 = vcmask 1044484
    %v3041 = vsel %vm3040, %v3030, %v3031
    %vm3042 = vcmask 1046534
    %v3043 = vsel %vm3042, %v3032, %v3033
    %vm3044 = vcmask 1045508
    %v3045 = vsel %vm3044, %v3041, %v3043
    %vm3046 = vcmask 1043456
    %v3047 = vsel %vm3046, %v3039, %v3045
    %3049 = vst [vmem:[#allocation8] sm:$0xff] %v3047
    // Predicated region
    $region26: #{tpu_custom_call.1} parent=1 // pred_check
      _
    $region27: #{tpu_custom_call.1} parent=1 // pred_check_branch
      %3051 = sbr.rel (0) target = $region29
    $region28: #{tpu_custom_call.1} parent=1 // pred_region
      %3053 = vsyncadd [#allocation4], 0
      %s3055 = sshll.u32 [#allocation8], 4
      %s3056 = int_to_ptr.vmem [resolvable:$true] %s3055
      %s3057 = sshll.u32 %s3, 4
      %s3058 = int_to_ptr.hbm [resolvable:$true] %s3057
      %3060 = dma.vmem_to_hbm [thread:$0]  %s3056, 128, %s3058, [#allocation4]
    $region29: #{tpu_custom_call.1} parent=1 // pred_fallthru
      _
    // Predicated region
    $region30: #{tpu_custom_call.1} parent=1 // pred_check
      _
    $region31: #{tpu_custom_call.1} parent=1 // pred_check_branch
      %3062 = sbr.rel (0) target = $region33
    $region32: #{tpu_custom_call.1} parent=1 // pred_region
      %3064 = dma.done [#allocation4], 128
    $region33: #{tpu_custom_call.1} parent=1 // pred_fallthru
      _
    %3065 = vsyncpa [#allocation3], 1
    %3066 = vsyncpa [#allocation6], 1
    %3067 = vsyncpa [#allocation4], 1

</llo_original>
